<compile_context>
chip_gen: v6e
topology: v6e:2x2x1
jax: 0.10.0
libtpu: 0.0.40
codegen_flags: <defaults>
</compile_context>

<pallas_src>
import jax
import jax.numpy as jnp
from jax.experimental import pallas as pl
from jax.experimental.pallas import tpu as pltpu


# Set to jnp.bfloat16 on v5e/v6e/v7x for the native-MXU path (review items 9/10);
# kept float32 here so the correctness assert stays at 1e-4 tolerance.
MXU_INPUT_DTYPE = jnp.float32


# ----------------------------------------------------------------------------
# Fused kernel: two x (depthwise3x3 -> pointwise1x1 -> BN -> ReLU), all in VMEM
#   x_ref  : (1, H, W, Cin)   one batch element, NHWC
#   w1_ref : (9*Cin, Cout)    depthwise+pointwise+BN folded weight, sub-block 1
#   s1_ref : (1, Cout)        folded bias/BN shift, sub-block 1
#   w2_ref : (9*Cout, Cout)   folded weight, sub-block 2
#   s2_ref : (1, Cout)        folded shift, sub-block 2
#   o_ref  : (1, Cout, H*W)   NCHW-flat, lane-dense output block
# ----------------------------------------------------------------------------
def sepconv2_kernel(x_ref, w1_ref, s1_ref, w2_ref, s2_ref, o_ref):
    H = x_ref.shape[1]
    W = x_ref.shape[2]
    Cout = o_ref.shape[1]

    def shifted_taps(x):
        """9 zero-padded 3x3 shifts of x:(H,W,C); taps[kh*3+kw][i,j]=x[i+kh-1,j+kw-1]."""
        Ht, Wt, C = x.shape
        zc = jnp.zeros((Ht, 1, C), x.dtype)   # zero column (W axis)
        zr = jnp.zeros((1, Wt, C), x.dtype)   # zero row    (H axis)
        # Column shifts (sublane axis) built once and reused across the 3 row shifts.
        # TODO(synk): at production channel counts, replace the sublane concats
        # with pltpu.roll + edge masks so the shift rides the (idle) XLU slot.
        cols = [
            jnp.concatenate([zc, x[:, :-1, :]], axis=1),   # dw = -1: out[:, j] = x[:, j-1]
            x,                                             # dw =  0
            jnp.concatenate([x[:, 1:, :], zc], axis=1),    # dw = +1: out[:, j] = x[:, j+1]
        ]
        taps = []
        for kh in range(3):          # dh = kh - 1 (outer axis -> cheap vreg re-index)
            for kw in range(3):
                c = cols[kw]
                if kh == 0:          # dh = -1: out[i] = c[i-1]
                    taps.append(jnp.concatenate([zr, c[:-1]], axis=0))
                elif kh == 1:        # dh = 0
                    taps.append(c)
                else:                # dh = +1: out[i] = c[i+1]
                    taps.append(jnp.concatenate([c[1:], zr], axis=0))
        return taps

    def dw_pw_bn_relu(x, w_comb, shift):
        """relu(im2col(x) @ w_comb + shift): one MXU matmul with K = 9*C."""
        C = x.shape[-1]
        im2col = jnp.concatenate(shifted_taps(x), axis=-1).reshape(H * W, 9 * C)
        y = jnp.dot(im2col.astype(MXU_INPUT_DTYPE),
                    w_comb.astype(MXU_INPUT_DTYPE),
                    preferred_element_type=jnp.float32)
        return jnp.maximum(y + shift, 0.0)                 # (H*W, Cout)

    x = x_ref[0].astype(jnp.float32)                       # (H, W, Cin)

    # Sub-block 1 (depthwise -> pointwise -> BN -> ReLU); Dropout = identity in eval.
    y1 = dw_pw_bn_relu(x, w1_ref[...], s1_ref[...]).reshape(H, W, Cout)
    # Sub-block 2 reads y1 straight from VMEM -- no HBM round trip.
    y2 = dw_pw_bn_relu(y1, w2_ref[...], s2_ref[...])       # (H*W, Cout)

    # Lane-dense, NCHW-flat store: lane dim = H*W (multiple of 128) -> unmasked vst.
    o_ref[...] = y2.T.reshape(1, Cout, H * W).astype(o_ref.dtype)


def sepconv_block_fused(x_nhwc, w1, s1, w2, s2):
    """x_nhwc: (N, H, W, Cin) -> (N, Cout, H*W) in one fused pallas_call."""
    N, H, W, Cin = x_nhwc.shape
    Cout = w1.shape[1]
    return pl.pallas_call(
        sepconv2_kernel,
        out_shape=jax.ShapeDtypeStruct((N, Cout, H * W), x_nhwc.dtype),
        grid=(N,),
        in_specs=[
            pl.BlockSpec((1, H, W, Cin), lambda n: (n, 0, 0, 0)),
            pl.BlockSpec((9 * Cin, Cout), lambda n: (0, 0)),
            pl.BlockSpec((1, Cout), lambda n: (0, 0)),
            pl.BlockSpec((9 * Cout, Cout), lambda n: (0, 0)),
            pl.BlockSpec((1, Cout), lambda n: (0, 0)),
        ],
        out_specs=pl.BlockSpec((1, Cout, H * W), lambda n: (n, 0, 0)),
        compiler_params=pltpu.CompilerParams(
            # Batch axis is independent -> megacore sharding on v7x.
            # TODO(synk): at production H/W add a parallel row-block grid axis
            # (overlapping index_map for the 1-px halo) to guarantee >=2 blocks.
            dimension_semantics=("parallel",),
            vmem_limit_bytes=32 * 1024 * 1024),  # well inside v7x's 64 MiB/TC
    )(x_nhwc, w1, s1, w2, s2)


# ----------------------------------------------------------------------------
# Parameter init (deterministic, synthetic — torch-style raw params)
# ----------------------------------------------------------------------------
def init_params(key, in_channels, out_channels):
    ks = jax.random.split(key, 16)

    def conv_w(k, shape, fan_in):
        bound = 1.0 / jnp.sqrt(fan_in)
        return jax.random.uniform(k, shape, jnp.float32, -bound, bound)

    p = {}
    # ---- sub-block 1 ----
    p["dw1_w"] = conv_w(ks[0], (9, in_channels), 9.0)
    p["dw1_b"] = conv_w(ks[1], (in_channels,), 9.0)
    p["pw1_w"] = conv_w(ks[2], (in_channels, out_channels), float(in_channels))
    p["pw1_b"] = conv_w(ks[3], (out_channels,), float(in_channels))
    p["bn1_gamma"] = 1.0 + 0.1 * jax.random.normal(ks[4], (out_channels,), jnp.float32)
    p["bn1_beta"] = 0.1 * jax.random.normal(ks[5], (out_channels,), jnp.float32)
    p["bn1_mean"] = 0.1 * jax.random.normal(ks[6], (out_channels,), jnp.float32)
    p["bn1_var"] = jax.random.uniform(ks[7], (out_channels,), jnp.float32, 0.5, 1.5)
    # ---- sub-block 2 ----
    p["dw2_w"] = conv_w(ks[8], (9, out_channels), 9.0)
    p["dw2_b"] = conv_w(ks[9], (out_channels,), 9.0)
    p["pw2_w"] = conv_w(ks[10], (out_channels, out_channels), float(out_channels))
    p["pw2_b"] = conv_w(ks[11], (out_channels,), float(out_channels))
    p["bn2_gamma"] = 1.0 + 0.1 * jax.random.normal(ks[12], (out_channels,), jnp.float32)
    p["bn2_beta"] = 0.1 * jax.random.normal(ks[13], (out_channels,), jnp.float32)
    p["bn2_mean"] = 0.1 * jax.random.normal(ks[14], (out_channels,), jnp.float32)
    p["bn2_var"] = jax.random.uniform(ks[15], (out_channels,), jnp.float32, 0.5, 1.5)
    return p


def fold_params(p, eps=1e-5):
    """Fold depthwise taps, conv biases and BN stats into one weight + one shift
    per sub-block:  relu(im2col(x) @ w_comb + shift)  ==  relu(BN(pw(dw(x))))."""
    def fold_one(dw_w, dw_b, pw_w, pw_b, gamma, beta, mean, var):
        scale = gamma * jax.lax.rsqrt(var + eps)                  # (Cout,)
        w_f = pw_w * scale[None, :]                               # (Cin, Cout)
        shift = beta - mean * scale + pw_b * scale + dw_b @ w_f   # (Cout,)
        # Depthwise folded into the pointwise weight: (9*Cin, Cout), K = 9*Cin.
        w_comb = (dw_w[:, :, None] * w_f[None, :, :]).reshape(-1, w_f.shape[1])
        return w_comb, shift[None, :]

    f = {}
    f["w1"], f["shift1"] = fold_one(
        p["dw1_w"], p["dw1_b"], p["pw1_w"], p["pw1_b"],
        p["bn1_gamma"], p["bn1_beta"], p["bn1_mean"], p["bn1_var"])
    f["w2"], f["shift2"] = fold_one(
        p["dw2_w"], p["dw2_b"], p["pw2_w"], p["pw2_b"],
        p["bn2_gamma"], p["bn2_beta"], p["bn2_mean"], p["bn2_var"])
    return f


# ----------------------------------------------------------------------------
# Forward pass — matches SeparableConvBlock.forward in eval mode
# ----------------------------------------------------------------------------
@jax.jit
def separable_conv_block(x_nchw, folded):
    N, Cin, H, W = x_nchw.shape
    Cout = folded["shift1"].shape[-1]
    # TODO(synk): a fully-NHWC model would drop this input-side transpose too;
    # the output side already comes back NCHW-flat (lane-dense) from the kernel.
    x = jnp.transpose(x_nchw, (0, 2, 3, 1))                    # NCHW -> NHWC
    out = sepconv_block_fused(x, folded["w1"], folded["shift1"],
                              folded["w2"], folded["shift2"])  # (N, Cout, H*W)
    # TODO(synk): Dropout is identity in eval mode; training-mode dropout/BN not modeled.
    return out.reshape(N, Cout, H, W)                          # free metadata reshape


# ----------------------------------------------------------------------------
# Pure-JAX reference (unfolded params) for correctness check
# ----------------------------------------------------------------------------
def reference_forward(x_nchw, p, eps=1e-5):
    x = jnp.transpose(x_nchw, (0, 2, 3, 1))  # NHWC

    def dw(x, w9c, b):
        C = x.shape[-1]
        w = w9c.reshape(3, 3, 1, C)  # HWIO with feature_group_count=C
        y = jax.lax.conv_general_dilated(
            x, w, window_strides=(1, 1), padding="SAME",
            dimension_numbers=("NHWC", "HWIO", "NHWC"),
            feature_group_count=C)
        return y + b

    def pw_bn_relu(x, w, b, gamma, beta, mean, var):
        y = jnp.einsum("nhwc,cd->nhwd", x, w) + b
        y = (y - mean) / jnp.sqrt(var + eps) * gamma + beta
        return jnp.maximum(y, 0.0)

    x = dw(x, p["dw1_w"], p["dw1_b"])
    x = pw_bn_relu(x, p["pw1_w"], p["pw1_b"],
                   p["bn1_gamma"], p["bn1_beta"], p["bn1_mean"], p["bn1_var"])
    x = dw(x, p["dw2_w"], p["dw2_b"])
    x = pw_bn_relu(x, p["pw2_w"], p["pw2_b"],
                   p["bn2_gamma"], p["bn2_beta"], p["bn2_mean"], p["bn2_var"])
    return jnp.transpose(x, (0, 3, 1, 2))


if __name__ == "__main__":
    key = jax.random.PRNGKey(0)
    k_x, k_p = jax.random.split(key)

    N, Cin, H, W = 2, 4, 16, 16
    Cout = 8
    x = jax.random.normal(k_x, (N, Cin, H, W), jnp.float32)  # NCHW like PyTorch
    params = init_params(k_p, Cin, Cout)
    folded = fold_params(params)

    out = separable_conv_block(x, folded)
    out = jax.block_until_ready(out)

    ref = jax.block_until_ready(reference_forward(x, params))
    assert out.shape == (N, Cout, H, W), out.shape
    assert jnp.allclose(out, ref, atol=1e-4, rtol=1e-4), float(
        jnp.max(jnp.abs(out - ref)))

    print("KERNEL_OK")
</pallas_src>

<mosaic_0001>
module attributes {stable_mosaic.version = 11 : i64} {
  func.func @sepconv2_kernel(%arg0: i32, %arg1: memref<1x16x16x4xf32, #tpu.memory_space<vmem>>, %arg2: memref<36x8xf32, #tpu.memory_space<vmem>>, %arg3: memref<1x8xf32, #tpu.memory_space<vmem>>, %arg4: memref<72x8xf32, #tpu.memory_space<vmem>>, %arg5: memref<1x8xf32, #tpu.memory_space<vmem>>, %arg6: memref<1x8x256xf32, #tpu.memory_space<vmem>>) attributes {dimension_semantics = [#tpu.dimension_semantics<parallel>], iteration_bounds = array<i64: 2>, scalar_prefetch = 0 : i64, scratch_operands = 0 : i64, tpu.core_type = #tpu.core_type<tc>, window_params = [{transform_indices = @transform_0, window_bounds = array<i64: 1, 16, 16, 4>}, {pipeline_mode = #tpu.pipeline_mode<synchronous>, transform_indices = @transform_1, window_bounds = array<i64: 36, 8>}, {pipeline_mode = #tpu.pipeline_mode<synchronous>, transform_indices = @transform_2, window_bounds = array<i64: 1, 8>}, {pipeline_mode = #tpu.pipeline_mode<synchronous>, transform_indices = @transform_3, window_bounds = array<i64: 72, 8>}, {pipeline_mode = #tpu.pipeline_mode<synchronous>, transform_indices = @transform_4, window_bounds = array<i64: 1, 8>}, {transform_indices = @transform_5, window_bounds = array<i64: 1, 8, 256>}]} {
    %c0 = arith.constant 0 : index
    %c0_0 = arith.constant 0 : index
    %c0_1 = arith.constant 0 : index
    %c0_2 = arith.constant 0 : index
    %0 = vector.load %arg1[%c0, %c0_0, %c0_1, %c0_2] : memref<1x16x16x4xf32, #tpu.memory_space<vmem>>, vector<1x16x16x4xf32>
    %1 = vector.shape_cast %0 : vector<1x16x16x4xf32> to vector<16x16x4xf32>
    %c0_3 = arith.constant 0 : index
    %c0_4 = arith.constant 0 : index
    %2 = vector.load %arg2[%c0_3, %c0_4] : memref<36x8xf32, #tpu.memory_space<vmem>>, vector<36x8xf32>
    %c0_5 = arith.constant 0 : index
    %c0_6 = arith.constant 0 : index
    %3 = vector.load %arg3[%c0_5, %c0_6] : memref<1x8xf32, #tpu.memory_space<vmem>>, vector<1x8xf32>
    %cst = arith.constant 0.000000e+00 : f32
    %4 = vector.broadcast %cst : f32 to vector<16x1x4xf32>
    %cst_7 = arith.constant 0.000000e+00 : f32
    %5 = vector.broadcast %cst_7 : f32 to vector<1x16x4xf32>
    %6 = vector.extract_strided_slice %1 {offsets = [0, 0, 0], sizes = [16, 15, 4], strides = [1, 1, 1]} : vector<16x16x4xf32> to vector<16x15x4xf32>
    %7 = tpu.concatenate %4, %6 in 1 : vector<16x1x4xf32>, vector<16x15x4xf32> -> vector<16x16x4xf32>
    %8 = vector.extract_strided_slice %1 {offsets = [0, 1, 0], sizes = [16, 15, 4], strides = [1, 1, 1]} : vector<16x16x4xf32> to vector<16x15x4xf32>
    %9 = tpu.concatenate %8, %4 in 1 : vector<16x15x4xf32>, vector<16x1x4xf32> -> vector<16x16x4xf32>
    %10 = vector.extract_strided_slice %7 {offsets = [0, 0, 0], sizes = [15, 16, 4], strides = [1, 1, 1]} : vector<16x16x4xf32> to vector<15x16x4xf32>
    %11 = tpu.concatenate %5, %10 in 0 : vector<1x16x4xf32>, vector<15x16x4xf32> -> vector<16x16x4xf32>
    %12 = vector.extract_strided_slice %1 {offsets = [0, 0, 0], sizes = [15, 16, 4], strides = [1, 1, 1]} : vector<16x16x4xf32> to vector<15x16x4xf32>
    %13 = tpu.concatenate %5, %12 in 0 : vector<1x16x4xf32>, vector<15x16x4xf32> -> vector<16x16x4xf32>
    %14 = vector.extract_strided_slice %9 {offsets = [0, 0, 0], sizes = [15, 16, 4], strides = [1, 1, 1]} : vector<16x16x4xf32> to vector<15x16x4xf32>
    %15 = tpu.concatenate %5, %14 in 0 : vector<1x16x4xf32>, vector<15x16x4xf32> -> vector<16x16x4xf32>
    %16 = vector.extract_strided_slice %7 {offsets = [1, 0, 0], sizes = [15, 16, 4], strides = [1, 1, 1]} : vector<16x16x4xf32> to vector<15x16x4xf32>
    %17 = tpu.concatenate %16, %5 in 0 : vector<15x16x4xf32>, vector<1x16x4xf32> -> vector<16x16x4xf32>
    %18 = vector.extract_strided_slice %1 {offsets = [1, 0, 0], sizes = [15, 16, 4], strides = [1, 1, 1]} : vector<16x16x4xf32> to vector<15x16x4xf32>
    %19 = tpu.concatenate %18, %5 in 0 : vector<15x16x4xf32>, vector<1x16x4xf32> -> vector<16x16x4xf32>
    %20 = vector.extract_strided_slice %9 {offsets = [1, 0, 0], sizes = [15, 16, 4], strides = [1, 1, 1]} : vector<16x16x4xf32> to vector<15x16x4xf32>
    %21 = tpu.concatenate %20, %5 in 0 : vector<15x16x4xf32>, vector<1x16x4xf32> -> vector<16x16x4xf32>
    %22 = tpu.concatenate %11, %13, %15, %7, %1, %9, %17, %19, %21 in 2 : vector<16x16x4xf32>, vector<16x16x4xf32>, vector<16x16x4xf32>, vector<16x16x4xf32>, vector<16x16x4xf32>, vector<16x16x4xf32>, vector<16x16x4xf32>, vector<16x16x4xf32>, vector<16x16x4xf32> -> vector<16x16x36xf32>
    %23 = vector.shape_cast %22 : vector<16x16x36xf32> to vector<256x36xf32>
    %cst_8 = arith.constant dense<0.000000e+00> : vector<256x8xf32>
    %24 = tpu.matmul %23, %2, %cst_8 {dimension_numbers = #tpu.dot_dimension_numbers<[1], [0], [0], [1], [0, 0, 1, 1], [], []>} : vector<256x36xf32>, vector<36x8xf32>, vector<256x8xf32> -> vector<256x8xf32>
    %25 = vector.broadcast %3 : vector<1x8xf32> to vector<256x8xf32>
    %26 = arith.addf %24, %25 : vector<256x8xf32>
    %cst_9 = arith.constant 0.000000e+00 : f32
    %27 = vector.broadcast %cst_9 : f32 to vector<256x8xf32>
    %28 = arith.maximumf %26, %27 : vector<256x8xf32>
    %29 = vector.shape_cast %28 : vector<256x8xf32> to vector<16x16x8xf32>
    %c0_10 = arith.constant 0 : index
    %c0_11 = arith.constant 0 : index
    %30 = vector.load %arg4[%c0_10, %c0_11] : memref<72x8xf32, #tpu.memory_space<vmem>>, vector<72x8xf32>
    %c0_12 = arith.constant 0 : index
    %c0_13 = arith.constant 0 : index
    %31 = vector.load %arg5[%c0_12, %c0_13] : memref<1x8xf32, #tpu.memory_space<vmem>>, vector<1x8xf32>
    %cst_14 = arith.constant 0.000000e+00 : f32
    %32 = vector.broadcast %cst_14 : f32 to vector<16x1x8xf32>
    %cst_15 = arith.constant 0.000000e+00 : f32
    %33 = vector.broadcast %cst_15 : f32 to vector<1x16x8xf32>
    %34 = vector.extract_strided_slice %29 {offsets = [0, 0, 0], sizes = [16, 15, 8], strides = [1, 1, 1]} : vector<16x16x8xf32> to vector<16x15x8xf32>
    %35 = tpu.concatenate %32, %34 in 1 : vector<16x1x8xf32>, vector<16x15x8xf32> -> vector<16x16x8xf32>
    %36 = vector.extract_strided_slice %29 {offsets = [0, 1, 0], sizes = [16, 15, 8], strides = [1, 1, 1]} : vector<16x16x8xf32> to vector<16x15x8xf32>
    %37 = tpu.concatenate %36, %32 in 1 : vector<16x15x8xf32>, vector<16x1x8xf32> -> vector<16x16x8xf32>
    %38 = vector.extract_strided_slice %35 {offsets = [0, 0, 0], sizes = [15, 16, 8], strides = [1, 1, 1]} : vector<16x16x8xf32> to vector<15x16x8xf32>
    %39 = tpu.concatenate %33, %38 in 0 : vector<1x16x8xf32>, vector<15x16x8xf32> -> vector<16x16x8xf32>
    %40 = vector.extract_strided_slice %29 {offsets = [0, 0, 0], sizes = [15, 16, 8], strides = [1, 1, 1]} : vector<16x16x8xf32> to vector<15x16x8xf32>
    %41 = tpu.concatenate %33, %40 in 0 : vector<1x16x8xf32>, vector<15x16x8xf32> -> vector<16x16x8xf32>
    %42 = vector.extract_strided_slice %37 {offsets = [0, 0, 0], sizes = [15, 16, 8], strides = [1, 1, 1]} : vector<16x16x8xf32> to vector<15x16x8xf32>
    %43 = tpu.concatenate %33, %42 in 0 : vector<1x16x8xf32>, vector<15x16x8xf32> -> vector<16x16x8xf32>
    %44 = vector.extract_strided_slice %35 {offsets = [1, 0, 0], sizes = [15, 16, 8], strides = [1, 1, 1]} : vector<16x16x8xf32> to vector<15x16x8xf32>
    %45 = tpu.concatenate %44, %33 in 0 : vector<15x16x8xf32>, vector<1x16x8xf32> -> vector<16x16x8xf32>
    %46 = vector.extract_strided_slice %29 {offsets = [1, 0, 0], sizes = [15, 16, 8], strides = [1, 1, 1]} : vector<16x16x8xf32> to vector<15x16x8xf32>
    %47 = tpu.concatenate %46, %33 in 0 : vector<15x16x8xf32>, vector<1x16x8xf32> -> vector<16x16x8xf32>
    %48 = vector.extract_strided_slice %37 {offsets = [1, 0, 0], sizes = [15, 16, 8], strides = [1, 1, 1]} : vector<16x16x8xf32> to vector<15x16x8xf32>
    %49 = tpu.concatenate %48, %33 in 0 : vector<15x16x8xf32>, vector<1x16x8xf32> -> vector<16x16x8xf32>
    %50 = tpu.concatenate %39, %41, %43, %35, %29, %37, %45, %47, %49 in 2 : vector<16x16x8xf32>, vector<16x16x8xf32>, vector<16x16x8xf32>, vector<16x16x8xf32>, vector<16x16x8xf32>, vector<16x16x8xf32>, vector<16x16x8xf32>, vector<16x16x8xf32>, vector<16x16x8xf32> -> vector<16x16x72xf32>
    %51 = vector.shape_cast %50 : vector<16x16x72xf32> to vector<256x72xf32>
    %cst_16 = arith.constant dense<0.000000e+00> : vector<256x8xf32>
    %52 = tpu.matmul %51, %30, %cst_16 {dimension_numbers = #tpu.dot_dimension_numbers<[1], [0], [0], [1], [0, 0, 1, 1], [], []>} : vector<256x72xf32>, vector<72x8xf32>, vector<256x8xf32> -> vector<256x8xf32>
    %53 = vector.broadcast %31 : vector<1x8xf32> to vector<256x8xf32>
    %54 = arith.addf %52, %53 : vector<256x8xf32>
    %cst_17 = arith.constant 0.000000e+00 : f32
    %55 = vector.broadcast %cst_17 : f32 to vector<256x8xf32>
    %56 = arith.maximumf %54, %55 : vector<256x8xf32>
    %57 = tpu.transpose %56, [1, 0] : vector<256x8xf32> -> vector<8x256xf32>
    %58 = vector.shape_cast %57 : vector<8x256xf32> to vector<1x8x256xf32>
    %c0_18 = arith.constant 0 : index
    %c0_19 = arith.constant 0 : index
    %c0_20 = arith.constant 0 : index
    %59 = vector.load %arg6[%c0_18, %c0_19, %c0_20] : memref<1x8x256xf32, #tpu.memory_space<vmem>>, vector<1x8x256xf32>
    tpu.vector_store %arg6[%c0_18, %c0_19, %c0_20], %58 {strides = array<i32>} : memref<1x8x256xf32, #tpu.memory_space<vmem>>, vector<1x8x256xf32>,
    return
  }
  func.func @transform_0(%arg0: i32) -> (i32, i32, i32, i32) {
    %c0_i32 = arith.constant 0 : i32
    %c0_i32_0 = arith.constant 0 : i32
    %c0_i32_1 = arith.constant 0 : i32
    %c0_i32_2 = arith.constant 0 : i32
    return %arg0, %c0_i32, %c0_i32_0, %c0_i32_1 : i32, i32, i32, i32
  }
  func.func @transform_1(%arg0: i32) -> (i32, i32) {
    %c0_i32 = arith.constant 0 : i32
    %c0_i32_0 = arith.constant 0 : i32
    %c0_i32_1 = arith.constant 0 : i32
    return %c0_i32, %c0_i32_0 : i32, i32
  }
  func.func @transform_2(%arg0: i32) -> (i32, i32) {
    %c0_i32 = arith.constant 0 : i32
    %c0_i32_0 = arith.constant 0 : i32
    %c0_i32_1 = arith.constant 0 : i32
    return %c0_i32, %c0_i32_0 : i32, i32
  }
  func.func @transform_3(%arg0: i32) -> (i32, i32) {
    %c0_i32 = arith.constant 0 : i32
    %c0_i32_0 = arith.constant 0 : i32
    %c0_i32_1 = arith.constant 0 : i32
    return %c0_i32, %c0_i32_0 : i32, i32
  }
  func.func @transform_4(%arg0: i32) -> (i32, i32) {
    %c0_i32 = arith.constant 0 : i32
    %c0_i32_0 = arith.constant 0 : i32
    %c0_i32_1 = arith.constant 0 : i32
    return %c0_i32, %c0_i32_0 : i32, i32
  }
  func.func @transform_5(%arg0: i32) -> (i32, i32, i32) {
    %c0_i32 = arith.constant 0 : i32
    %c0_i32_0 = arith.constant 0 : i32
    %c0_i32_1 = arith.constant 0 : i32
    return %arg0, %c0_i32, %c0_i32_0 : i32, i32, i32
  }
}

</mosaic_0001>

<llo_original>
// kernel: separable_conv_block.1
$region0: #{separable_conv_block.1}
  #allocation0 [shape = 'u32[]', space=smem, size = 0x4, offset = 0x4, fixed_abs, tag = 'smem constant byte address 0x4 - core index']
  #allocation1 [shape = 'u32[144,128]{1,0:T(1,128)}', space=vmem, size = 0x12000, scoped, tag = 'internal scratch']
  %s0 = inlined_call_operand.vmem [shape: f32[2,16,16,4], index: 0, kind: input, shape index: {}]
  %s1 = inlined_call_operand.vmem [shape: f32[36,8], index: 1, kind: input, shape index: {}]
  %s2 = inlined_call_operand.vmem [shape: f32[1,8], index: 2, kind: input, shape index: {}]
  %s3 = inlined_call_operand.vmem [shape: f32[72,8], index: 3, kind: input, shape index: {}]
  %s4 = inlined_call_operand.vmem [shape: f32[1,8], index: 4, kind: input, shape index: {}]
  %s5 = inlined_call_operand.vmem [shape: f32[2,8,256], index: 5, kind: output, shape index: {}]
  %s6 = sld [smem:[#allocation0]]
  $region53: #{separable_conv_block.1} parent=0
    _
  %s8 = ssub.s32 1, %s6
  %s9 = scalar_select 0, %s8, %s6
  loop: start=0, step=1, limit=4
  $region2: #{separable_conv_block.1} parent=0 // loop_pre_header
    _
  $region3: #{separable_conv_block.1} parent=0 // loop_header
    %s11 = sphi 0, %s15
    %p12 = scmp.ge.s32.totalorder %s11, 4
    %s21 = sphi 0, %s23
    %s24 = sphi 0, %s21
    %s25 = sphi 0, %s24
    %s41 = sphi 0, %s25
    %s45 = sphi 0, %s45
    %s47 = sphi 0, %s45
    %s48 = sphi 0, %s47
    %s62 = sphi 0, %s48
    %s66 = sphi 0, %s66
    %s68 = sphi 0, %s66
    %s69 = sphi 0, %s68
    %s83 = sphi 0, %s69
    %s87 = sphi 0, %s87
    %s89 = sphi 0, %s87
    %s90 = sphi 0, %s89
    %s104 = sphi 0, %s90
    %s108 = sphi 0, %s108
    %s110 = sphi 0, %s108
    %s111 = sphi 0, %s110
    %s125 = sphi 0, %s111
    %s131 = sphi 0, %s133
    %s134 = sphi 0, %s131
    %s135 = sphi 0, %s134
    %s151 = sphi 0, %s135
  $region4: #{separable_conv_block.1} parent=0 // loop_header_branch
    %14 = sbr.rel (%p12) target = $region8
  $region5: #{separable_conv_block.1} parent=0 // loop_body
    %s16 = ssub.s32 %s11, 1
    %s17 = ssub.s32 %s11, 2
    %s18 = sadd.s32 %s11, 1
    %s19 = ssub.s32 %s11, %s18
    %p20 = scmp.eq.s32.totalorder %s19, 0
    %s22 = sadd.s32 %s21, 1
    %s23 = scalar_select %p20, %s21, %s22
    %p26 = pneg %p20
    %p27 = scmp.eq.s32.totalorder %s11, 1
    %p28 = por %p26, %p27
    %p29 = scmp.ne.s32.totalorder %s21, %s24
    %p30 = scmp.eq.s32.totalorder %s11, 0
    %p31 = por %p29, %p30
    %p32 = scmp.ne.s32.totalorder %s21, %s24
    %p33 = scmp.eq.s32.totalorder %s16, 1
    %p34 = por %p32, %p33
    %p35 = scmp.ne.s32.totalorder %s24, %s25
    %p36 = scmp.eq.s32.totalorder %s16, 0
    %p37 = por %p35, %p36
    %p38 = scmp.ne.s32.totalorder %s24, %s25
    %p39 = scmp.eq.s32.totalorder %s17, 1
    %p40 = por %p38, %p39
    %p42 = scmp.ne.s32.totalorder %s25, %s41
    %p43 = scmp.eq.s32.totalorder %s17, 0
    %p44 = por %p42, %p43
    %s46 = sadd.s32 %s45, 1
    %p49 = scmp.eq.s32.totalorder %s11, 1
    %p50 = scmp.ne.s32.totalorder %s45, %s47
    %p51 = scmp.eq.s32.totalorder %s11, 0
    %p52 = por %p50, %p51
    %p53 = scmp.ne.s32.totalorder %s45, %s47
    %p54 = scmp.eq.s32.totalorder %s16, 1
    %p55 = por %p53, %p54
    %p56 = scmp.ne.s32.totalorder %s47, %s48
    %p57 = scmp.eq.s32.totalorder %s16, 0
    %p58 = por %p56, %p57
    %p59 = scmp.ne.s32.totalorder %s47, %s48
    %p60 = scmp.eq.s32.totalorder %s17, 1
    %p61 = por %p59, %p60
    %p63 = scmp.ne.s32.totalorder %s48, %s62
    %p64 = scmp.eq.s32.totalorder %s17, 0
    %p65 = por %p63, %p64
    %s67 = sadd.s32 %s66, 1
    %p70 = scmp.eq.s32.totalorder %s11, 1
    %p71 = scmp.ne.s32.totalorder %s66, %s68
    %p72 = scmp.eq.s32.totalorder %s11, 0
    %p73 = por %p71, %p72
    %p74 = scmp.ne.s32.totalorder %s66, %s68
    %p75 = scmp.eq.s32.totalorder %s16, 1
    %p76 = por %p74, %p75
    %p77 = scmp.ne.s32.totalorder %s68, %s69
    %p78 = scmp.eq.s32.totalorder %s16, 0
    %p79 = por %p77, %p78
    %p80 = scmp.ne.s32.totalorder %s68, %s69
    %p81 = scmp.eq.s32.totalorder %s17, 1
    %p82 = por %p80, %p81
    %p84 = scmp.ne.s32.totalorder %s69, %s83
    %p85 = scmp.eq.s32.totalorder %s17, 0
    %p86 = por %p84, %p85
    %s88 = sadd.s32 %s87, 1
    %p91 = scmp.eq.s32.totalorder %s11, 1
    %p92 = scmp.ne.s32.totalorder %s87, %s89
    %p93 = scmp.eq.s32.totalorder %s11, 0
    %p94 = por %p92, %p93
    %p95 = scmp.ne.s32.totalorder %s87, %s89
    %p96 = scmp.eq.s32.totalorder %s16, 1
    %p97 = por %p95, %p96
    %p98 = scmp.ne.s32.totalorder %s89, %s90
    %p99 = scmp.eq.s32.totalorder %s16, 0
    %p100 = por %p98, %p99
    %p101 = scmp.ne.s32.totalorder %s89, %s90
    %p102 = scmp.eq.s32.totalorder %s17, 1
    %p103 = por %p101, %p102
    %p105 = scmp.ne.s32.totalorder %s90, %s104
    %p106 = scmp.eq.s32.totalorder %s17, 0
    %p107 = por %p105, %p106
    %s109 = sadd.s32 %s108, 1
    %p112 = scmp.eq.s32.totalorder %s11, 1
    %p113 = scmp.ne.s32.totalorder %s108, %s110
    %p114 = scmp.eq.s32.totalorder %s11, 0
    %p115 = por %p113, %p114
    %p116 = scmp.ne.s32.totalorder %s108, %s110
    %p117 = scmp.eq.s32.totalorder %s16, 1
    %p118 = por %p116, %p117
    %p119 = scmp.ne.s32.totalorder %s110, %s111
    %p120 = scmp.eq.s32.totalorder %s16, 0
    %p121 = por %p119, %p120
    %p122 = scmp.ne.s32.totalorder %s110, %s111
    %p123 = scmp.eq.s32.totalorder %s17, 1
    %p124 = por %p122, %p123
    %p126 = scmp.ne.s32.totalorder %s111, %s125
    %p127 = scmp.eq.s32.totalorder %s17, 0
    %p128 = por %p126, %p127
    %s129 = ssub.s32 %s11, %s18
    %p130 = scmp.eq.s32.totalorder %s129, 0
    %s132 = sadd.s32 %s131, 1
    %s133 = scalar_select %p130, %s131, %s132
    %p136 = pneg %p130
    %p137 = scmp.eq.s32.totalorder %s11, 1
    %p138 = por %p136, %p137
    %p139 = scmp.ne.s32.totalorder %s131, %s134
    %p140 = scmp.eq.s32.totalorder %s11, 0
    %p141 = por %p139, %p140
    %p142 = scmp.ne.s32.totalorder %s131, %s134
    %p143 = scmp.eq.s32.totalorder %s16, 1
    %p144 = por %p142, %p143
    %p145 = scmp.ne.s32.totalorder %s134, %s135
    %p146 = scmp.eq.s32.totalorder %s16, 0
    %p147 = por %p145, %p146
    %p148 = scmp.ne.s32.totalorder %s134, %s135
    %p149 = scmp.eq.s32.totalorder %s17, 1
    %p150 = por %p148, %p149
    %p152 = scmp.ne.s32.totalorder %s135, %s151
    %p153 = scmp.eq.s32.totalorder %s17, 0
    %p154 = por %p152, %p153
    %p155 = scmp.le.s32.totalorder 1, %s11
    %p156 = scmp.lt.s32.totalorder %s11, 3
    %p157 = pnand %p155, %p156
    %p158 = pneg %p157
    // Predicated region
    $region9: #{separable_conv_block.1} parent=5 // pred_check
      _
    $region10: #{separable_conv_block.1} parent=5 // pred_check_branch
      %160 = sbr.rel (%p157) target = $region12
    $region11: #{separable_conv_block.1} parent=5 // pred_region
      %s161 = ssub.s32 %s11, 1
      // Predicated region
      $region13: #{separable_conv_block.1} parent=11 // pred_check
        %p162 = pneg %p58
      $region14: #{separable_conv_block.1} parent=11 // pred_check_branch
        %164 = sbr.rel (%p162) target = $region16
      $region15: #{separable_conv_block.1} parent=11 // pred_region
        _
      $region16: #{separable_conv_block.1} parent=11 // pred_fallthru
        _
      // Predicated region
      $region17: #{separable_conv_block.1} parent=11 // pred_check
        %p165 = pneg %p79
      $region18: #{separable_conv_block.1} parent=11 // pred_check_branch
        %167 = sbr.rel (%p165) target = $region20
      $region19: #{separable_conv_block.1} parent=11 // pred_region
        _
      $region20: #{separable_conv_block.1} parent=11 // pred_fallthru
        _
      // Predicated region
      $region21: #{separable_conv_block.1} parent=11 // pred_check
        %p168 = pneg %p100
      $region22: #{separable_conv_block.1} parent=11 // pred_check_branch
        %170 = sbr.rel (%p168) target = $region24
      $region23: #{separable_conv_block.1} parent=11 // pred_region
        _
      $region24: #{separable_conv_block.1} parent=11 // pred_fallthru
        _
      // Predicated region
      $region25: #{separable_conv_block.1} parent=11 // pred_check
        %p171 = pneg %p121
      $region26: #{separable_conv_block.1} parent=11 // pred_check_branch
        %173 = sbr.rel (%p171) target = $region28
      $region27: #{separable_conv_block.1} parent=11 // pred_region
        _
      $region28: #{separable_conv_block.1} parent=11 // pred_fallthru
        _
    $region12: #{separable_conv_block.1} parent=5 // pred_fallthru
      _
    %p174 = scmp.lt.s32.totalorder %s11, 2
    // Predicated region
    $region29: #{separable_conv_block.1} parent=5 // pred_check
      %p175 = pneg %p174
    $region30: #{separable_conv_block.1} parent=5 // pred_check_branch
      %177 = sbr.rel (%p175) target = $region32
    $region31: #{separable_conv_block.1} parent=5 // pred_region
      // Predicated region
      $region33: #{separable_conv_block.1} parent=31 // pred_check
        %p178 = pneg %p31
      $region34: #{separable_conv_block.1} parent=31 // pred_check_branch
        %180 = sbr.rel (%p178) target = $region36
      $region35: #{separable_conv_block.1} parent=31 // pred_region
        %p181 = scmp.lt.s32.totalorder %s11, 1
        %s182 = scalar_select %p181, %s11, 1
        %s183 = smul.addr %s182, 32
        %s184 = smul.addr %s183, 8
        %s185 = scalar_lea.vmem %s0, %s184
      $region36: #{separable_conv_block.1} parent=31 // pred_fallthru
        _
    $region32: #{separable_conv_block.1} parent=5 // pred_fallthru
      _
    %p186 = scmp.le.s32.totalorder 1, %s11
    %p187 = scmp.lt.s32.totalorder %s11, 3
    %p188 = pnand %p186, %p187
    %p189 = pneg %p188
    // Predicated region
    $region37: #{separable_conv_block.1} parent=5 // pred_check
      _
    $region38: #{separable_conv_block.1} parent=5 // pred_check_branch
      %191 = sbr.rel (%p188) target = $region40
    $region39: #{separable_conv_block.1} parent=5 // pred_region
      %s192 = ssub.s32 %s11, 1
      %p193 = scmp.lt.s32.totalorder %s16, 1
      %s194 = scalar_select %p193, %s16, 1
      %s195 = smul.addr %s194, 32
      %s196 = smul.addr %s195, 8
      %s197 = scalar_lea.vmem %s0, %s196
      %p198 = pneg %p37
      %p199 = pneg %p34
      %p200 = pneg %p58
      %p201 = pneg %p55
      %p202 = pneg %p79
      %p203 = pneg %p76
      %p204 = pneg %p100
      %p205 = pneg %p97
      %p206 = pneg %p121
      %p207 = pneg %p118
      %p208 = pneg %p147
      %p209 = pneg %p144
      %p210 = scmp.lt.s32.totalorder %s16, 1
      %s211 = scalar_select %p210, %s16, 1
      %s212 = smul.addr %s211, 2
      %s213 = smul.addr %s212, 8
      %s214 = scalar_lea.vmem %s5, %s213
      %p215 = scmp.lt.s32.totalorder %s16, 1
      %s216 = scalar_select %p215, %s16, 1
      %s217 = smul.addr %s216, 32
      %s218 = smul.addr %s217, 8
      %s219 = scalar_lea.vmem %s0, %s218
      %p220 = scmp.lt.s32.totalorder %s16, 1
      %s221 = scalar_select %p220, %s16, 1
      %s222 = smul.addr %s221, 2
      %s223 = smul.addr %s222, 8
      %s224 = scalar_lea.vmem %s5, %s223
      %v225 = vld [vmem:[%s219] sm:$0xff]
      %v226 = vld [vmem:[%s219 + $0x8] sm:$0xff]
      %v227 = vld [vmem:[%s219 + $0x10] sm:$0xff]
      %v228 = vld [vmem:[%s219 + $0x18] sm:$0xff]
      %v229 = vld [vmem:[%s219 + $0x20] sm:$0xff]
      %v230 = vld [vmem:[%s219 + $0x28] sm:$0xff]
      %v231 = vld [vmem:[%s219 + $0x30] sm:$0xff]
      %v232 = vld [vmem:[%s219 + $0x38] sm:$0xff]
      %v233 = vld [vmem:[%s219 + $0x40] sm:$0xff]
      %v234 = vld [vmem:[%s219 + $0x48] sm:$0xff]
      %v235 = vld [vmem:[%s219 + $0x50] sm:$0xff]
      %v236 = vld [vmem:[%s219 + $0x58] sm:$0xff]
      %v237 = vld [vmem:[%s219 + $0x60] sm:$0xff]
      %v238 = vld [vmem:[%s219 + $0x68] sm:$0xff]
      %v239 = vld [vmem:[%s219 + $0x70] sm:$0xff]
      %v240 = vld [vmem:[%s219 + $0x78] sm:$0xff]
      %v241 = vld [vmem:[%s219 + $0x80] sm:$0xff]
      %v242 = vld [vmem:[%s219 + $0x88] sm:$0xff]
      %v243 = vld [vmem:[%s219 + $0x90] sm:$0xff]
      %v244 = vld [vmem:[%s219 + $0x98] sm:$0xff]
      %v245 = vld [vmem:[%s219 + $0xa0] sm:$0xff]
      %v246 = vld [vmem:[%s219 + $0xa8] sm:$0xff]
      %v247 = vld [vmem:[%s219 + $0xb0] sm:$0xff]
      %v248 = vld [vmem:[%s219 + $0xb8] sm:$0xff]
      %v249 = vld [vmem:[%s219 + $0xc0] sm:$0xff]
      %v250 = vld [vmem:[%s219 + $0xc8] sm:$0xff]
      %v251 = vld [vmem:[%s219 + $0xd0] sm:$0xff]
      %v252 = vld [vmem:[%s219 + $0xd8] sm:$0xff]
      %v253 = vld [vmem:[%s219 + $0xe0] sm:$0xff]
      %v254 = vld [vmem:[%s219 + $0xe8] sm:$0xff]
      %v255 = vld [vmem:[%s219 + $0xf0] sm:$0xff]
      %v256 = vld [vmem:[%s219 + $0xf8] sm:$0xff]
      %v257 = vld [vmem:[%s1] sm:$0xff]
      %v258 = vld [vmem:[%s1 + $0x8] sm:$0xff]
      %v259 = vld [vmem:[%s1 + $0x10] sm:$0xff]
      %v260 = vld [vmem:[%s1 + $0x18] sm:$0xff]
      %v261 = vld [vmem:[%s1 + $0x20] sm:$0xf]
      %v262 = vld [vmem:[%s2] sm:$0x1]
      %vm295 = vcmask 1040384
      %v296 = vrot.slane %v225, 7
      %v297 = vrot.slane %v226, 7
      %v298 = vsel %vm295, %v296, %v297
      %v299 = vrot.slane %v227, 7
      %v300 = vrot.slane %v228, 7
      %v301 = vsel %vm295, %v299, %v300
      %v302 = vrot.slane %v229, 7
      %v303 = vrot.slane %v230, 7
      %v304 = vsel %vm295, %v302, %v303
      %v305 = vrot.slane %v231, 7
      %v306 = vrot.slane %v232, 7
      %v307 = vsel %vm295, %v305, %v306
      %v308 = vrot.slane %v233, 7
      %v309 = vrot.slane %v234, 7
      %v310 = vsel %vm295, %v308, %v309
      %v311 = vrot.slane %v235, 7
      %v312 = vrot.slane %v236, 7
      %v313 = vsel %vm295, %v311, %v312
      %v314 = vrot.slane %v237, 7
      %v315 = vrot.slane %v238, 7
      %v316 = vsel %vm295, %v314, %v315
      %v317 = vrot.slane %v239, 7
      %v318 = vrot.slane %v240, 7
      %v319 = vsel %vm295, %v317, %v318
      %v320 = vrot.slane %v241, 7
      %v321 = vrot.slane %v242, 7
      %v322 = vsel %vm295, %v320, %v321
      %v323 = vrot.slane %v243, 7
      %v324 = vrot.slane %v244, 7
      %v325 = vsel %vm295, %v323, %v324
      %v326 = vrot.slane %v245, 7
      %v327 = vrot.slane %v246, 7
      %v328 = vsel %vm295, %v326, %v327
      %v329 = vrot.slane %v247, 7
      %v330 = vrot.slane %v248, 7
      %v331 = vsel %vm295, %v329, %v330
      %v332 = vrot.slane %v249, 7
      %v333 = vrot.slane %v250, 7
      %v334 = vsel %vm295, %v332, %v333
      %v335 = vrot.slane %v251, 7
      %v336 = vrot.slane %v252, 7
      %v337 = vsel %vm295, %v335, %v336
      %v338 = vrot.slane %v253, 7
      %v339 = vrot.slane %v254, 7
      %v340 = vsel %vm295, %v338, %v339
      %v341 = vrot.slane %v255, 7
      %v342 = vrot.slane %v256, 7
      %v343 = vsel %vm295, %v341, %v342
      %v375 = vsel %vm295, 0.0, %v296
      %v376 = vsel %vm295, 0.0, %v299
      %v377 = vsel %vm295, 0.0, %v302
      %v378 = vsel %vm295, 0.0, %v305
      %v379 = vsel %vm295, 0.0, %v308
      %v380 = vsel %vm295, 0.0, %v311
      %v381 = vsel %vm295, 0.0, %v314
      %v382 = vsel %vm295, 0.0, %v317
      %v383 = vsel %vm295, 0.0, %v320
      %v384 = vsel %vm295, 0.0, %v323
      %v385 = vsel %vm295, 0.0, %v326
      %v386 = vsel %vm295, 0.0, %v329
      %v387 = vsel %vm295, 0.0, %v332
      %v388 = vsel %vm295, 0.0, %v335
      %v389 = vsel %vm295, 0.0, %v338
      %v390 = vsel %vm295, 0.0, %v341
      %vm391 = vcmask 1046528
      %v392 = vrot.slane %v225, 1
      %v393 = vrot.slane %v226, 1
      %v394 = vsel %vm391, %v392, %v393
      %v395 = vrot.slane %v227, 1
      %v396 = vrot.slane %v228, 1
      %v397 = vsel %vm391, %v395, %v396
      %v398 = vrot.slane %v229, 1
      %v399 = vrot.slane %v230, 1
      %v400 = vsel %vm391, %v398, %v399
      %v401 = vrot.slane %v231, 1
      %v402 = vrot.slane %v232, 1
      %v403 = vsel %vm391, %v401, %v402
      %v404 = vrot.slane %v233, 1
      %v405 = vrot.slane %v234, 1
      %v406 = vsel %vm391, %v404, %v405
      %v407 = vrot.slane %v235, 1
      %v408 = vrot.slane %v236, 1
      %v409 = vsel %vm391, %v407, %v408
      %v410 = vrot.slane %v237, 1
      %v411 = vrot.slane %v238, 1
      %v412 = vsel %vm391, %v410, %v411
      %v413 = vrot.slane %v239, 1
      %v414 = vrot.slane %v240, 1
      %v415 = vsel %vm391, %v413, %v414
      %v416 = vrot.slane %v241, 1
      %v417 = vrot.slane %v242, 1
      %v418 = vsel %vm391, %v416, %v417
      %v419 = vrot.slane %v243, 1
      %v420 = vrot.slane %v244, 1
      %v421 = vsel %vm391, %v419, %v420
      %v422 = vrot.slane %v245, 1
      %v423 = vrot.slane %v246, 1
      %v424 = vsel %vm391, %v422, %v423
      %v425 = vrot.slane %v247, 1
      %v426 = vrot.slane %v248, 1
      %v427 = vsel %vm391, %v425, %v426
      %v428 = vrot.slane %v249, 1
      %v429 = vrot.slane %v250, 1
      %v430 = vsel %vm391, %v428, %v429
      %v431 = vrot.slane %v251, 1
      %v432 = vrot.slane %v252, 1
      %v433 = vsel %vm391, %v431, %v432
      %v434 = vrot.slane %v253, 1
      %v435 = vrot.slane %v254, 1
      %v436 = vsel %vm391, %v434, %v435
      %v437 = vrot.slane %v255, 1
      %v438 = vrot.slane %v256, 1
      %v439 = vsel %vm391, %v437, %v438
      %v456 = vsel %vm391, %v393, 0.0
      %v457 = vsel %vm391, %v396, 0.0
      %v458 = vsel %vm391, %v399, 0.0
      %v459 = vsel %vm391, %v402, 0.0
      %v460 = vsel %vm391, %v405, 0.0
      %v461 = vsel %vm391, %v408, 0.0
      %v462 = vsel %vm391, %v411, 0.0
      %v463 = vsel %vm391, %v414, 0.0
      %v464 = vsel %vm391, %v417, 0.0
      %v465 = vsel %vm391, %v420, 0.0
      %v466 = vsel %vm391, %v423, 0.0
      %v467 = vsel %vm391, %v426, 0.0
      %v468 = vsel %vm391, %v429, 0.0
      %v469 = vsel %vm391, %v432, 0.0
      %v470 = vsel %vm391, %v435, 0.0
      %v471 = vsel %vm391, %v438, 0.0
      %473 = vrot.lane.b32.xlu0 0.0, 4
      %v474 = vpop.permute.xlu0 %473
      %475 = vrot.lane.b32.xlu0 %v225, 4
      %v476 = vpop.permute.xlu0 %475
      %477 = vrot.lane.b32.xlu0 %v226, 4
      %v478 = vpop.permute.xlu0 %477
      %479 = vrot.lane.b32.xlu0 %v227, 4
      %v480 = vpop.permute.xlu0 %479
      %481 = vrot.lane.b32.xlu0 %v228, 4
      %v482 = vpop.permute.xlu0 %481
      %483 = vrot.lane.b32.xlu0 %v229, 4
      %v484 = vpop.permute.xlu0 %483
      %485 = vrot.lane.b32.xlu0 %v230, 4
      %v486 = vpop.permute.xlu0 %485
      %487 = vrot.lane.b32.xlu0 %v231, 4
      %v488 = vpop.permute.xlu0 %487
      %489 = vrot.lane.b32.xlu0 %v232, 4
      %v490 = vpop.permute.xlu0 %489
      %491 = vrot.lane.b32.xlu0 %v233, 4
      %v492 = vpop.permute.xlu0 %491
      %493 = vrot.lane.b32.xlu0 %v234, 4
      %v494 = vpop.permute.xlu0 %493
      %495 = vrot.lane.b32.xlu0 %v235, 4
      %v496 = vpop.permute.xlu0 %495
      %497 = vrot.lane.b32.xlu0 %v236, 4
      %v498 = vpop.permute.xlu0 %497
      %499 = vrot.lane.b32.xlu0 %v237, 4
      %v500 = vpop.permute.xlu0 %499
      %501 = vrot.lane.b32.xlu0 %v238, 4
      %v502 = vpop.permute.xlu0 %501
      %503 = vrot.lane.b32.xlu0 %v239, 4
      %v504 = vpop.permute.xlu0 %503
      %505 = vrot.lane.b32.xlu0 %v240, 4
      %v506 = vpop.permute.xlu0 %505
      %507 = vrot.lane.b32.xlu0 %v241, 4
      %v508 = vpop.permute.xlu0 %507
      %509 = vrot.lane.b32.xlu0 %v242, 4
      %v510 = vpop.permute.xlu0 %509
      %511 = vrot.lane.b32.xlu0 %v243, 4
      %v512 = vpop.permute.xlu0 %511
      %513 = vrot.lane.b32.xlu0 %v244, 4
      %v514 = vpop.permute.xlu0 %513
      %515 = vrot.lane.b32.xlu0 %v245, 4
      %v516 = vpop.permute.xlu0 %515
      %517 = vrot.lane.b32.xlu0 %v246, 4
      %v518 = vpop.permute.xlu0 %517
      %519 = vrot.lane.b32.xlu0 %v247, 4
      %v520 = vpop.permute.xlu0 %519
      %521 = vrot.lane.b32.xlu0 %v248, 4
      %v522 = vpop.permute.xlu0 %521
      %523 = vrot.lane.b32.xlu0 %v249, 4
      %v524 = vpop.permute.xlu0 %523
      %525 = vrot.lane.b32.xlu0 %v250, 4
      %v526 = vpop.permute.xlu0 %525
      %527 = vrot.lane.b32.xlu0 %v251, 4
      %v528 = vpop.permute.xlu0 %527
      %529 = vrot.lane.b32.xlu0 %v252, 4
      %v530 = vpop.permute.xlu0 %529
      %531 = vrot.lane.b32.xlu0 %v253, 4
      %v532 = vpop.permute.xlu0 %531
      %533 = vrot.lane.b32.xlu0 %v254, 4
      %v534 = vpop.permute.xlu0 %533
      %581 = vrot.lane.b32.xlu0 0.0, 8
      %v582 = vpop.permute.xlu0 %581
      %583 = vrot.lane.b32.xlu0 %v394, 8
      %v584 = vpop.permute.xlu0 %583
      %585 = vrot.lane.b32.xlu0 %v456, 8
      %v586 = vpop.permute.xlu0 %585
      %587 = vrot.lane.b32.xlu0 %v397, 8
      %v588 = vpop.permute.xlu0 %587
      %589 = vrot.lane.b32.xlu0 %v457, 8
      %v590 = vpop.permute.xlu0 %589
      %591 = vrot.lane.b32.xlu0 %v400, 8
      %v592 = vpop.permute.xlu0 %591
      %593 = vrot.lane.b32.xlu0 %v458, 8
      %v594 = vpop.permute.xlu0 %593
      %595 = vrot.lane.b32.xlu0 %v403, 8
      %v596 = vpop.permute.xlu0 %595
      %597 = vrot.lane.b32.xlu0 %v459, 8
      %v598 = vpop.permute.xlu0 %597
      %599 = vrot.lane.b32.xlu0 %v406, 8
      %v600 = vpop.permute.xlu0 %599
      %601 = vrot.lane.b32.xlu0 %v460, 8
      %v602 = vpop.permute.xlu0 %601
      %603 = vrot.lane.b32.xlu0 %v409, 8
      %v604 = vpop.permute.xlu0 %603
      %605 = vrot.lane.b32.xlu0 %v461, 8
      %v606 = vpop.permute.xlu0 %605
      %607 = vrot.lane.b32.xlu0 %v412, 8
      %v608 = vpop.permute.xlu0 %607
      %609 = vrot.lane.b32.xlu0 %v462, 8
      %v610 = vpop.permute.xlu0 %609
      %611 = vrot.lane.b32.xlu0 %v415, 8
      %v612 = vpop.permute.xlu0 %611
      %613 = vrot.lane.b32.xlu0 %v463, 8
      %v614 = vpop.permute.xlu0 %613
      %615 = vrot.lane.b32.xlu0 %v418, 8
      %v616 = vpop.permute.xlu0 %615
      %617 = vrot.lane.b32.xlu0 %v464, 8
      %v618 = vpop.permute.xlu0 %617
      %619 = vrot.lane.b32.xlu0 %v421, 8
      %v620 = vpop.permute.xlu0 %619
      %621 = vrot.lane.b32.xlu0 %v465, 8
      %v622 = vpop.permute.xlu0 %621
      %623 = vrot.lane.b32.xlu0 %v424, 8
      %v624 = vpop.permute.xlu0 %623
      %625 = vrot.lane.b32.xlu0 %v466, 8
      %v626 = vpop.permute.xlu0 %625
      %627 = vrot.lane.b32.xlu0 %v427, 8
      %v628 = vpop.permute.xlu0 %627
      %629 = vrot.lane.b32.xlu0 %v467, 8
      %v630 = vpop.permute.xlu0 %629
      %631 = vrot.lane.b32.xlu0 %v430, 8
      %v632 = vpop.permute.xlu0 %631
      %633 = vrot.lane.b32.xlu0 %v468, 8
      %v634 = vpop.permute.xlu0 %633
      %635 = vrot.lane.b32.xlu0 %v433, 8
      %v636 = vpop.permute.xlu0 %635
      %637 = vrot.lane.b32.xlu0 %v469, 8
      %v638 = vpop.permute.xlu0 %637
      %639 = vrot.lane.b32.xlu0 %v436, 8
      %v640 = vpop.permute.xlu0 %639
      %641 = vrot.lane.b32.xlu0 %v470, 8
      %v642 = vpop.permute.xlu0 %641
      %690 = vrot.lane.b32.xlu0 %v375, 12
      %v691 = vpop.permute.xlu0 %690
      %692 = vrot.lane.b32.xlu0 %v298, 12
      %v693 = vpop.permute.xlu0 %692
      %694 = vrot.lane.b32.xlu0 %v376, 12
      %v695 = vpop.permute.xlu0 %694
      %696 = vrot.lane.b32.xlu0 %v301, 12
      %v697 = vpop.permute.xlu0 %696
      %698 = vrot.lane.b32.xlu0 %v377, 12
      %v699 = vpop.permute.xlu0 %698
      %700 = vrot.lane.b32.xlu0 %v304, 12
      %v701 = vpop.permute.xlu0 %700
      %702 = vrot.lane.b32.xlu0 %v378, 12
      %v703 = vpop.permute.xlu0 %702
      %704 = vrot.lane.b32.xlu0 %v307, 12
      %v705 = vpop.permute.xlu0 %704
      %706 = vrot.lane.b32.xlu0 %v379, 12
      %v707 = vpop.permute.xlu0 %706
      %708 = vrot.lane.b32.xlu0 %v310, 12
      %v709 = vpop.permute.xlu0 %708
      %710 = vrot.lane.b32.xlu0 %v380, 12
      %v711 = vpop.permute.xlu0 %710
      %712 = vrot.lane.b32.xlu0 %v313, 12
      %v713 = vpop.permute.xlu0 %712
      %714 = vrot.lane.b32.xlu0 %v381, 12
      %v715 = vpop.permute.xlu0 %714
      %716 = vrot.lane.b32.xlu0 %v316, 12
      %v717 = vpop.permute.xlu0 %716
      %718 = vrot.lane.b32.xlu0 %v382, 12
      %v719 = vpop.permute.xlu0 %718
      %720 = vrot.lane.b32.xlu0 %v319, 12
      %v721 = vpop.permute.xlu0 %720
      %722 = vrot.lane.b32.xlu0 %v383, 12
      %v723 = vpop.permute.xlu0 %722
      %724 = vrot.lane.b32.xlu0 %v322, 12
      %v725 = vpop.permute.xlu0 %724
      %726 = vrot.lane.b32.xlu0 %v384, 12
      %v727 = vpop.permute.xlu0 %726
      %728 = vrot.lane.b32.xlu0 %v325, 12
      %v729 = vpop.permute.xlu0 %728
      %730 = vrot.lane.b32.xlu0 %v385, 12
      %v731 = vpop.permute.xlu0 %730
      %732 = vrot.lane.b32.xlu0 %v328, 12
      %v733 = vpop.permute.xlu0 %732
      %734 = vrot.lane.b32.xlu0 %v386, 12
      %v735 = vpop.permute.xlu0 %734
      %736 = vrot.lane.b32.xlu0 %v331, 12
      %v737 = vpop.permute.xlu0 %736
      %738 = vrot.lane.b32.xlu0 %v387, 12
      %v739 = vpop.permute.xlu0 %738
      %740 = vrot.lane.b32.xlu0 %v334, 12
      %v741 = vpop.permute.xlu0 %740
      %742 = vrot.lane.b32.xlu0 %v388, 12
      %v743 = vpop.permute.xlu0 %742
      %744 = vrot.lane.b32.xlu0 %v337, 12
      %v745 = vpop.permute.xlu0 %744
      %746 = vrot.lane.b32.xlu0 %v389, 12
      %v747 = vpop.permute.xlu0 %746
      %748 = vrot.lane.b32.xlu0 %v340, 12
      %v749 = vpop.permute.xlu0 %748
      %750 = vrot.lane.b32.xlu0 %v390, 12
      %v751 = vpop.permute.xlu0 %750
      %752 = vrot.lane.b32.xlu0 %v343, 12
      %v753 = vpop.permute.xlu0 %752
      %786 = vrot.lane.b32.xlu0 %v225, 16
      %v787 = vpop.permute.xlu0 %786
      %788 = vrot.lane.b32.xlu0 %v226, 16
      %v789 = vpop.permute.xlu0 %788
      %790 = vrot.lane.b32.xlu0 %v227, 16
      %v791 = vpop.permute.xlu0 %790
      %792 = vrot.lane.b32.xlu0 %v228, 16
      %v793 = vpop.permute.xlu0 %792
      %794 = vrot.lane.b32.xlu0 %v229, 16
      %v795 = vpop.permute.xlu0 %794
      %796 = vrot.lane.b32.xlu0 %v230, 16
      %v797 = vpop.permute.xlu0 %796
      %798 = vrot.lane.b32.xlu0 %v231, 16
      %v799 = vpop.permute.xlu0 %798
      %800 = vrot.lane.b32.xlu0 %v232, 16
      %v801 = vpop.permute.xlu0 %800
      %802 = vrot.lane.b32.xlu0 %v233, 16
      %v803 = vpop.permute.xlu0 %802
      %804 = vrot.lane.b32.xlu0 %v234, 16
      %v805 = vpop.permute.xlu0 %804
      %806 = vrot.lane.b32.xlu0 %v235, 16
      %v807 = vpop.permute.xlu0 %806
      %808 = vrot.lane.b32.xlu0 %v236, 16
      %v809 = vpop.permute.xlu0 %808
      %810 = vrot.lane.b32.xlu0 %v237, 16
      %v811 = vpop.permute.xlu0 %810
      %812 = vrot.lane.b32.xlu0 %v238, 16
      %v813 = vpop.permute.xlu0 %812
      %814 = vrot.lane.b32.xlu0 %v239, 16
      %v815 = vpop.permute.xlu0 %814
      %816 = vrot.lane.b32.xlu0 %v240, 16
      %v817 = vpop.permute.xlu0 %816
      %818 = vrot.lane.b32.xlu0 %v241, 16
      %v819 = vpop.permute.xlu0 %818
      %820 = vrot.lane.b32.xlu0 %v242, 16
      %v821 = vpop.permute.xlu0 %820
      %822 = vrot.lane.b32.xlu0 %v243, 16
      %v823 = vpop.permute.xlu0 %822
      %824 = vrot.lane.b32.xlu0 %v244, 16
      %v825 = vpop.permute.xlu0 %824
      %826 = vrot.lane.b32.xlu0 %v245, 16
      %v827 = vpop.permute.xlu0 %826
      %828 = vrot.lane.b32.xlu0 %v246, 16
      %v829 = vpop.permute.xlu0 %828
      %830 = vrot.lane.b32.xlu0 %v247, 16
      %v831 = vpop.permute.xlu0 %830
      %832 = vrot.lane.b32.xlu0 %v248, 16
      %v833 = vpop.permute.xlu0 %832
      %834 = vrot.lane.b32.xlu0 %v249, 16
      %v835 = vpop.permute.xlu0 %834
      %836 = vrot.lane.b32.xlu0 %v250, 16
      %v837 = vpop.permute.xlu0 %836
      %838 = vrot.lane.b32.xlu0 %v251, 16
      %v839 = vpop.permute.xlu0 %838
      %840 = vrot.lane.b32.xlu0 %v252, 16
      %v841 = vpop.permute.xlu0 %840
      %842 = vrot.lane.b32.xlu0 %v253, 16
      %v843 = vpop.permute.xlu0 %842
      %844 = vrot.lane.b32.xlu0 %v254, 16
      %v845 = vpop.permute.xlu0 %844
      %846 = vrot.lane.b32.xlu0 %v255, 16
      %v847 = vpop.permute.xlu0 %846
      %848 = vrot.lane.b32.xlu0 %v256, 16
      %v849 = vpop.permute.xlu0 %848
      %883 = vrot.lane.b32.xlu0 %v394, 20
      %v884 = vpop.permute.xlu0 %883
      %885 = vrot.lane.b32.xlu0 %v456, 20
      %v886 = vpop.permute.xlu0 %885
      %887 = vrot.lane.b32.xlu0 %v397, 20
      %v888 = vpop.permute.xlu0 %887
      %889 = vrot.lane.b32.xlu0 %v457, 20
      %v890 = vpop.permute.xlu0 %889
      %891 = vrot.lane.b32.xlu0 %v400, 20
      %v892 = vpop.permute.xlu0 %891
      %893 = vrot.lane.b32.xlu0 %v458, 20
      %v894 = vpop.permute.xlu0 %893
      %895 = vrot.lane.b32.xlu0 %v403, 20
      %v896 = vpop.permute.xlu0 %895
      %897 = vrot.lane.b32.xlu0 %v459, 20
      %v898 = vpop.permute.xlu0 %897
      %899 = vrot.lane.b32.xlu0 %v406, 20
      %v900 = vpop.permute.xlu0 %899
      %901 = vrot.lane.b32.xlu0 %v460, 20
      %v902 = vpop.permute.xlu0 %901
      %903 = vrot.lane.b32.xlu0 %v409, 20
      %v904 = vpop.permute.xlu0 %903
      %905 = vrot.lane.b32.xlu0 %v461, 20
      %v906 = vpop.permute.xlu0 %905
      %907 = vrot.lane.b32.xlu0 %v412, 20
      %v908 = vpop.permute.xlu0 %907
      %909 = vrot.lane.b32.xlu0 %v462, 20
      %v910 = vpop.permute.xlu0 %909
      %911 = vrot.lane.b32.xlu0 %v415, 20
      %v912 = vpop.permute.xlu0 %911
      %913 = vrot.lane.b32.xlu0 %v463, 20
      %v914 = vpop.permute.xlu0 %913
      %915 = vrot.lane.b32.xlu0 %v418, 20
      %v916 = vpop.permute.xlu0 %915
      %917 = vrot.lane.b32.xlu0 %v464, 20
      %v918 = vpop.permute.xlu0 %917
      %919 = vrot.lane.b32.xlu0 %v421, 20
      %v920 = vpop.permute.xlu0 %919
      %921 = vrot.lane.b32.xlu0 %v465, 20
      %v922 = vpop.permute.xlu0 %921
      %923 = vrot.lane.b32.xlu0 %v424, 20
      %v924 = vpop.permute.xlu0 %923
      %925 = vrot.lane.b32.xlu0 %v466, 20
      %v926 = vpop.permute.xlu0 %925
      %927 = vrot.lane.b32.xlu0 %v427, 20
      %v928 = vpop.permute.xlu0 %927
      %929 = vrot.lane.b32.xlu0 %v467, 20
      %v930 = vpop.permute.xlu0 %929
      %931 = vrot.lane.b32.xlu0 %v430, 20
      %v932 = vpop.permute.xlu0 %931
      %933 = vrot.lane.b32.xlu0 %v468, 20
      %v934 = vpop.permute.xlu0 %933
      %935 = vrot.lane.b32.xlu0 %v433, 20
      %v936 = vpop.permute.xlu0 %935
      %937 = vrot.lane.b32.xlu0 %v469, 20
      %v938 = vpop.permute.xlu0 %937
      %939 = vrot.lane.b32.xlu0 %v436, 20
      %v940 = vpop.permute.xlu0 %939
      %941 = vrot.lane.b32.xlu0 %v470, 20
      %v942 = vpop.permute.xlu0 %941
      %943 = vrot.lane.b32.xlu0 %v439, 20
      %v944 = vpop.permute.xlu0 %943
      %945 = vrot.lane.b32.xlu0 %v471, 20
      %v946 = vpop.permute.xlu0 %945
      %979 = vrot.lane.b32.xlu0 %v376, 24
      %v980 = vpop.permute.xlu0 %979
      %981 = vrot.lane.b32.xlu0 %v301, 24
      %v982 = vpop.permute.xlu0 %981
      %983 = vrot.lane.b32.xlu0 %v377, 24
      %v984 = vpop.permute.xlu0 %983
      %985 = vrot.lane.b32.xlu0 %v304, 24
      %v986 = vpop.permute.xlu0 %985
      %987 = vrot.lane.b32.xlu0 %v378, 24
      %v988 = vpop.permute.xlu0 %987
      %989 = vrot.lane.b32.xlu0 %v307, 24
      %v990 = vpop.permute.xlu0 %989
      %991 = vrot.lane.b32.xlu0 %v379, 24
      %v992 = vpop.permute.xlu0 %991
      %993 = vrot.lane.b32.xlu0 %v310, 24
      %v994 = vpop.permute.xlu0 %993
      %995 = vrot.lane.b32.xlu0 %v380, 24
      %v996 = vpop.permute.xlu0 %995
      %997 = vrot.lane.b32.xlu0 %v313, 24
      %v998 = vpop.permute.xlu0 %997
      %999 = vrot.lane.b32.xlu0 %v381, 24
      %v1000 = vpop.permute.xlu0 %999
      %1001 = vrot.lane.b32.xlu0 %v316, 24
      %v1002 = vpop.permute.xlu0 %1001
      %1003 = vrot.lane.b32.xlu0 %v382, 24
      %v1004 = vpop.permute.xlu0 %1003
      %1005 = vrot.lane.b32.xlu0 %v319, 24
      %v1006 = vpop.permute.xlu0 %1005
      %1007 = vrot.lane.b32.xlu0 %v383, 24
      %v1008 = vpop.permute.xlu0 %1007
      %1009 = vrot.lane.b32.xlu0 %v322, 24
      %v1010 = vpop.permute.xlu0 %1009
      %1011 = vrot.lane.b32.xlu0 %v384, 24
      %v1012 = vpop.permute.xlu0 %1011
      %1013 = vrot.lane.b32.xlu0 %v325, 24
      %v1014 = vpop.permute.xlu0 %1013
      %1015 = vrot.lane.b32.xlu0 %v385, 24
      %v1016 = vpop.permute.xlu0 %1015
      %1017 = vrot.lane.b32.xlu0 %v328, 24
      %v1018 = vpop.permute.xlu0 %1017
      %1019 = vrot.lane.b32.xlu0 %v386, 24
      %v1020 = vpop.permute.xlu0 %1019
      %1021 = vrot.lane.b32.xlu0 %v331, 24
      %v1022 = vpop.permute.xlu0 %1021
      %1023 = vrot.lane.b32.xlu0 %v387, 24
      %v1024 = vpop.permute.xlu0 %1023
      %1025 = vrot.lane.b32.xlu0 %v334, 24
      %v1026 = vpop.permute.xlu0 %1025
      %1027 = vrot.lane.b32.xlu0 %v388, 24
      %v1028 = vpop.permute.xlu0 %1027
      %1029 = vrot.lane.b32.xlu0 %v337, 24
      %v1030 = vpop.permute.xlu0 %1029
      %1031 = vrot.lane.b32.xlu0 %v389, 24
      %v1032 = vpop.permute.xlu0 %1031
      %1033 = vrot.lane.b32.xlu0 %v340, 24
      %v1034 = vpop.permute.xlu0 %1033
      %1035 = vrot.lane.b32.xlu0 %v390, 24
      %v1036 = vpop.permute.xlu0 %1035
      %1037 = vrot.lane.b32.xlu0 %v343, 24
      %v1038 = vpop.permute.xlu0 %1037
      %1039 = vrot.lane.b32.xlu0 0.0, 24
      %v1040 = vpop.permute.xlu0 %1039
      %1072 = vrot.lane.b32.xlu0 %v227, 28
      %v1073 = vpop.permute.xlu0 %1072
      %1074 = vrot.lane.b32.xlu0 %v228, 28
      %v1075 = vpop.permute.xlu0 %1074
      %1076 = vrot.lane.b32.xlu0 %v229, 28
      %v1077 = vpop.permute.xlu0 %1076
      %1078 = vrot.lane.b32.xlu0 %v230, 28
      %v1079 = vpop.permute.xlu0 %1078
      %1080 = vrot.lane.b32.xlu0 %v231, 28
      %v1081 = vpop.permute.xlu0 %1080
      %1082 = vrot.lane.b32.xlu0 %v232, 28
      %v1083 = vpop.permute.xlu0 %1082
      %1084 = vrot.lane.b32.xlu0 %v233, 28
      %v1085 = vpop.permute.xlu0 %1084
      %1086 = vrot.lane.b32.xlu0 %v234, 28
      %v1087 = vpop.permute.xlu0 %1086
      %1088 = vrot.lane.b32.xlu0 %v235, 28
      %v1089 = vpop.permute.xlu0 %1088
      %1090 = vrot.lane.b32.xlu0 %v236, 28
      %v1091 = vpop.permute.xlu0 %1090
      %1092 = vrot.lane.b32.xlu0 %v237, 28
      %v1093 = vpop.permute.xlu0 %1092
      %1094 = vrot.lane.b32.xlu0 %v238, 28
      %v1095 = vpop.permute.xlu0 %1094
      %1096 = vrot.lane.b32.xlu0 %v239, 28
      %v1097 = vpop.permute.xlu0 %1096
      %1098 = vrot.lane.b32.xlu0 %v240, 28
      %v1099 = vpop.permute.xlu0 %1098
      %1100 = vrot.lane.b32.xlu0 %v241, 28
      %v1101 = vpop.permute.xlu0 %1100
      %1102 = vrot.lane.b32.xlu0 %v242, 28
      %v1103 = vpop.permute.xlu0 %1102
      %1104 = vrot.lane.b32.xlu0 %v243, 28
      %v1105 = vpop.permute.xlu0 %1104
      %1106 = vrot.lane.b32.xlu0 %v244, 28
      %v1107 = vpop.permute.xlu0 %1106
      %1108 = vrot.lane.b32.xlu0 %v245, 28
      %v1109 = vpop.permute.xlu0 %1108
      %1110 = vrot.lane.b32.xlu0 %v246, 28
      %v1111 = vpop.permute.xlu0 %1110
      %1112 = vrot.lane.b32.xlu0 %v247, 28
      %v1113 = vpop.permute.xlu0 %1112
      %1114 = vrot.lane.b32.xlu0 %v248, 28
      %v1115 = vpop.permute.xlu0 %1114
      %1116 = vrot.lane.b32.xlu0 %v249, 28
      %v1117 = vpop.permute.xlu0 %1116
      %1118 = vrot.lane.b32.xlu0 %v250, 28
      %v1119 = vpop.permute.xlu0 %1118
      %1120 = vrot.lane.b32.xlu0 %v251, 28
      %v1121 = vpop.permute.xlu0 %1120
      %1122 = vrot.lane.b32.xlu0 %v252, 28
      %v1123 = vpop.permute.xlu0 %1122
      %1124 = vrot.lane.b32.xlu0 %v253, 28
      %v1125 = vpop.permute.xlu0 %1124
      %1126 = vrot.lane.b32.xlu0 %v254, 28
      %v1127 = vpop.permute.xlu0 %1126
      %1128 = vrot.lane.b32.xlu0 %v255, 28
      %v1129 = vpop.permute.xlu0 %1128
      %1130 = vrot.lane.b32.xlu0 %v256, 28
      %v1131 = vpop.permute.xlu0 %1130
      %1132 = vrot.lane.b32.xlu0 0.0, 28
      %v1133 = vpop.permute.xlu0 %1132
      %1165 = vrot.lane.b32.xlu0 %v397, 32
      %v1166 = vpop.permute.xlu0 %1165
      %1167 = vrot.lane.b32.xlu0 %v457, 32
      %v1168 = vpop.permute.xlu0 %1167
      %1169 = vrot.lane.b32.xlu0 %v400, 32
      %v1170 = vpop.permute.xlu0 %1169
      %1171 = vrot.lane.b32.xlu0 %v458, 32
      %v1172 = vpop.permute.xlu0 %1171
      %1173 = vrot.lane.b32.xlu0 %v403, 32
      %v1174 = vpop.permute.xlu0 %1173
      %1175 = vrot.lane.b32.xlu0 %v459, 32
      %v1176 = vpop.permute.xlu0 %1175
      %1177 = vrot.lane.b32.xlu0 %v406, 32
      %v1178 = vpop.permute.xlu0 %1177
      %1179 = vrot.lane.b32.xlu0 %v460, 32
      %v1180 = vpop.permute.xlu0 %1179
      %1181 = vrot.lane.b32.xlu0 %v409, 32
      %v1182 = vpop.permute.xlu0 %1181
      %1183 = vrot.lane.b32.xlu0 %v461, 32
      %v1184 = vpop.permute.xlu0 %1183
      %1185 = vrot.lane.b32.xlu0 %v412, 32
      %v1186 = vpop.permute.xlu0 %1185
      %1187 = vrot.lane.b32.xlu0 %v462, 32
      %v1188 = vpop.permute.xlu0 %1187
      %1189 = vrot.lane.b32.xlu0 %v415, 32
      %v1190 = vpop.permute.xlu0 %1189
      %1191 = vrot.lane.b32.xlu0 %v463, 32
      %v1192 = vpop.permute.xlu0 %1191
      %1193 = vrot.lane.b32.xlu0 %v418, 32
      %v1194 = vpop.permute.xlu0 %1193
      %1195 = vrot.lane.b32.xlu0 %v464, 32
      %v1196 = vpop.permute.xlu0 %1195
      %1197 = vrot.lane.b32.xlu0 %v421, 32
      %v1198 = vpop.permute.xlu0 %1197
      %1199 = vrot.lane.b32.xlu0 %v465, 32
      %v1200 = vpop.permute.xlu0 %1199
      %1201 = vrot.lane.b32.xlu0 %v424, 32
      %v1202 = vpop.permute.xlu0 %1201
      %1203 = vrot.lane.b32.xlu0 %v466, 32
      %v1204 = vpop.permute.xlu0 %1203
      %1205 = vrot.lane.b32.xlu0 %v427, 32
      %v1206 = vpop.permute.xlu0 %1205
      %1207 = vrot.lane.b32.xlu0 %v467, 32
      %v1208 = vpop.permute.xlu0 %1207
      %1209 = vrot.lane.b32.xlu0 %v430, 32
      %v1210 = vpop.permute.xlu0 %1209
      %1211 = vrot.lane.b32.xlu0 %v468, 32
      %v1212 = vpop.permute.xlu0 %1211
      %1213 = vrot.lane.b32.xlu0 %v433, 32
      %v1214 = vpop.permute.xlu0 %1213
      %1215 = vrot.lane.b32.xlu0 %v469, 32
      %v1216 = vpop.permute.xlu0 %1215
      %1217 = vrot.lane.b32.xlu0 %v436, 32
      %v1218 = vpop.permute.xlu0 %1217
      %1219 = vrot.lane.b32.xlu0 %v470, 32
      %v1220 = vpop.permute.xlu0 %1219
      %1221 = vrot.lane.b32.xlu0 %v439, 32
      %v1222 = vpop.permute.xlu0 %1221
      %1223 = vrot.lane.b32.xlu0 %v471, 32
      %v1224 = vpop.permute.xlu0 %1223
      %1225 = vrot.lane.b32.xlu0 0.0, 32
      %v1226 = vpop.permute.xlu0 %1225
      %vm1258 = vcmask 31744
      %v1259 = vsel %vm1258, 0.0, %v474
      %v1260 = vsel %vm1258, %v375, %v476
      %v1261 = vsel %vm1258, %v298, %v478
      %v1262 = vsel %vm1258, %v376, %v480
      %v1263 = vsel %vm1258, %v301, %v482
      %v1264 = vsel %vm1258, %v377, %v484
      %v1265 = vsel %vm1258, %v304, %v486
      %v1266 = vsel %vm1258, %v378, %v488
      %v1267 = vsel %vm1258, %v307, %v490
      %v1268 = vsel %vm1258, %v379, %v492
      %v1269 = vsel %vm1258, %v310, %v494
      %v1270 = vsel %vm1258, %v380, %v496
      %v1271 = vsel %vm1258, %v313, %v498
      %v1272 = vsel %vm1258, %v381, %v500
      %v1273 = vsel %vm1258, %v316, %v502
      %v1274 = vsel %vm1258, %v382, %v504
      %v1275 = vsel %vm1258, %v319, %v506
      %v1276 = vsel %vm1258, %v383, %v508
      %v1277 = vsel %vm1258, %v322, %v510
      %v1278 = vsel %vm1258, %v384, %v512
      %v1279 = vsel %vm1258, %v325, %v514
      %v1280 = vsel %vm1258, %v385, %v516
      %v1281 = vsel %vm1258, %v328, %v518
      %v1282 = vsel %vm1258, %v386, %v520
      %v1283 = vsel %vm1258, %v331, %v522
      %v1284 = vsel %vm1258, %v387, %v524
      %v1285 = vsel %vm1258, %v334, %v526
      %v1286 = vsel %vm1258, %v388, %v528
      %v1287 = vsel %vm1258, %v337, %v530
      %v1288 = vsel %vm1258, %v389, %v532
      %v1289 = vsel %vm1258, %v340, %v534
      %vm1290 = vcmask 64512
      %v1291 = vsel %vm1290, %v1259, %v582
      %v1292 = vsel %vm1290, %v1260, %v584
      %v1293 = vsel %vm1290, %v1261, %v586
      %v1294 = vsel %vm1290, %v1262, %v588
      %v1295 = vsel %vm1290, %v1263, %v590
      %v1296 = vsel %vm1290, %v1264, %v592
      %v1297 = vsel %vm1290, %v1265, %v594
      %v1298 = vsel %vm1290, %v1266, %v596
      %v1299 = vsel %vm1290, %v1267, %v598
      %v1300 = vsel %vm1290, %v1268, %v600
      %v1301 = vsel %vm1290, %v1269, %v602
      %v1302 = vsel %vm1290, %v1270, %v604
      %v1303 = vsel %vm1290, %v1271, %v606
      %v1304 = vsel %vm1290, %v1272, %v608
      %v1305 = vsel %vm1290, %v1273, %v610
      %v1306 = vsel %vm1290, %v1274, %v612
      %v1307 = vsel %vm1290, %v1275, %v614
      %v1308 = vsel %vm1290, %v1276, %v616
      %v1309 = vsel %vm1290, %v1277, %v618
      %v1310 = vsel %vm1290, %v1278, %v620
      %v1311 = vsel %vm1290, %v1279, %v622
      %v1312 = vsel %vm1290, %v1280, %v624
      %v1313 = vsel %vm1290, %v1281, %v626
      %v1314 = vsel %vm1290, %v1282, %v628
      %v1315 = vsel %vm1290, %v1283, %v630
      %v1316 = vsel %vm1290, %v1284, %v632
      %v1317 = vsel %vm1290, %v1285, %v634
      %v1318 = vsel %vm1290, %v1286, %v636
      %v1319 = vsel %vm1290, %v1287, %v638
      %v1320 = vsel %vm1290, %v1288, %v640
      %v1321 = vsel %vm1290, %v1289, %v642
      %vm1322 = vcmask 97280
      %v1323 = vsel %vm1322, %v1291, %v691
      %v1324 = vsel %vm1322, %v1291, %v693
      %v1325 = vsel %vm1322, %v1292, %v695
      %v1326 = vsel %vm1322, %v1293, %v697
      %v1327 = vsel %vm1322, %v1294, %v699
      %v1328 = vsel %vm1322, %v1295, %v701
      %v1329 = vsel %vm1322, %v1296, %v703
      %v1330 = vsel %vm1322, %v1297, %v705
      %v1331 = vsel %vm1322, %v1298, %v707
      %v1332 = vsel %vm1322, %v1299, %v709
      %v1333 = vsel %vm1322, %v1300, %v711
      %v1334 = vsel %vm1322, %v1301, %v713
      %v1335 = vsel %vm1322, %v1302, %v715
      %v1336 = vsel %vm1322, %v1303, %v717
      %v1337 = vsel %vm1322, %v1304, %v719
      %v1338 = vsel %vm1322, %v1305, %v721
      %v1339 = vsel %vm1322, %v1306, %v723
      %v1340 = vsel %vm1322, %v1307, %v725
      %v1341 = vsel %vm1322, %v1308, %v727
      %v1342 = vsel %vm1322, %v1309, %v729
      %v1343 = vsel %vm1322, %v1310, %v731
      %v1344 = vsel %vm1322, %v1311, %v733
      %v1345 = vsel %vm1322, %v1312, %v735
      %v1346 = vsel %vm1322, %v1313, %v737
      %v1347 = vsel %vm1322, %v1314, %v739
      %v1348 = vsel %vm1322, %v1315, %v741
      %v1349 = vsel %vm1322, %v1316, %v743
      %v1350 = vsel %vm1322, %v1317, %v745
      %v1351 = vsel %vm1322, %v1318, %v747
      %v1352 = vsel %vm1322, %v1319, %v749
      %v1353 = vsel %vm1322, %v1320, %v751
      %v1354 = vsel %vm1322, %v1321, %v753
      %vm1355 = vcmask 130048
      %v1356 = vsel %vm1355, %v1323, %v787
      %v1357 = vsel %vm1355, %v1324, %v789
      %v1358 = vsel %vm1355, %v1325, %v791
      %v1359 = vsel %vm1355, %v1326, %v793
      %v1360 = vsel %vm1355, %v1327, %v795
      %v1361 = vsel %vm1355, %v1328, %v797
      %v1362 = vsel %vm1355, %v1329, %v799
      %v1363 = vsel %vm1355, %v1330, %v801
      %v1364 = vsel %vm1355, %v1331, %v803
      %v1365 = vsel %vm1355, %v1332, %v805
      %v1366 = vsel %vm1355, %v1333, %v807
      %v1367 = vsel %vm1355, %v1334, %v809
      %v1368 = vsel %vm1355, %v1335, %v811
      %v1369 = vsel %vm1355, %v1336, %v813
      %v1370 = vsel %vm1355, %v1337, %v815
      %v1371 = vsel %vm1355, %v1338, %v817
      %v1372 = vsel %vm1355, %v1339, %v819
      %v1373 = vsel %vm1355, %v1340, %v821
      %v1374 = vsel %vm1355, %v1341, %v823
      %v1375 = vsel %vm1355, %v1342, %v825
      %v1376 = vsel %vm1355, %v1343, %v827
      %v1377 = vsel %vm1355, %v1344, %v829
      %v1378 = vsel %vm1355, %v1345, %v831
      %v1379 = vsel %vm1355, %v1346, %v833
      %v1380 = vsel %vm1355, %v1347, %v835
      %v1381 = vsel %vm1355, %v1348, %v837
      %v1382 = vsel %vm1355, %v1349, %v839
      %v1383 = vsel %vm1355, %v1350, %v841
      %v1384 = vsel %vm1355, %v1351, %v843
      %v1385 = vsel %vm1355, %v1352, %v845
      %v1386 = vsel %vm1355, %v1353, %v847
      %v1387 = vsel %vm1355, %v1354, %v849
      %vm1388 = vcmask 162816
      %v1389 = vsel %vm1388, %v1356, %v884
      %v1390 = vsel %vm1388, %v1357, %v886
      %v1391 = vsel %vm1388, %v1358, %v888
      %v1392 = vsel %vm1388, %v1359, %v890
      %v1393 = vsel %vm1388, %v1360, %v892
      %v1394 = vsel %vm1388, %v1361, %v894
      %v1395 = vsel %vm1388, %v1362, %v896
      %v1396 = vsel %vm1388, %v1363, %v898
      %v1397 = vsel %vm1388, %v1364, %v900
      %v1398 = vsel %vm1388, %v1365, %v902
      %v1399 = vsel %vm1388, %v1366, %v904
      %v1400 = vsel %vm1388, %v1367, %v906
      %v1401 = vsel %vm1388, %v1368, %v908
      %v1402 = vsel %vm1388, %v1369, %v910
      %v1403 = vsel %vm1388, %v1370, %v912
      %v1404 = vsel %vm1388, %v1371, %v914
      %v1405 = vsel %vm1388, %v1372, %v916
      %v1406 = vsel %vm1388, %v1373, %v918
      %v1407 = vsel %vm1388, %v1374, %v920
      %v1408 = vsel %vm1388, %v1375, %v922
      %v1409 = vsel %vm1388, %v1376, %v924
      %v1410 = vsel %vm1388, %v1377, %v926
      %v1411 = vsel %vm1388, %v1378, %v928
      %v1412 = vsel %vm1388, %v1379, %v930
      %v1413 = vsel %vm1388, %v1380, %v932
      %v1414 = vsel %vm1388, %v1381, %v934
      %v1415 = vsel %vm1388, %v1382, %v936
      %v1416 = vsel %vm1388, %v1383, %v938
      %v1417 = vsel %vm1388, %v1384, %v940
      %v1418 = vsel %vm1388, %v1385, %v942
      %v1419 = vsel %vm1388, %v1386, %v944
      %v1420 = vsel %vm1388, %v1387, %v946
      %vm1421 = vcmask 195584
      %v1422 = vsel %vm1421, %v1389, %v980
      %v1423 = vsel %vm1421, %v1390, %v982
      %v1424 = vsel %vm1421, %v1391, %v984
      %v1425 = vsel %vm1421, %v1392, %v986
      %v1426 = vsel %vm1421, %v1393, %v988
      %v1427 = vsel %vm1421, %v1394, %v990
      %v1428 = vsel %vm1421, %v1395, %v992
      %v1429 = vsel %vm1421, %v1396, %v994
      %v1430 = vsel %vm1421, %v1397, %v996
      %v1431 = vsel %vm1421, %v1398, %v998
      %v1432 = vsel %vm1421, %v1399, %v1000
      %v1433 = vsel %vm1421, %v1400, %v1002
      %v1434 = vsel %vm1421, %v1401, %v1004
      %v1435 = vsel %vm1421, %v1402, %v1006
      %v1436 = vsel %vm1421, %v1403, %v1008
      %v1437 = vsel %vm1421, %v1404, %v1010
      %v1438 = vsel %vm1421, %v1405, %v1012
      %v1439 = vsel %vm1421, %v1406, %v1014
      %v1440 = vsel %vm1421, %v1407, %v1016
      %v1441 = vsel %vm1421, %v1408, %v1018
      %v1442 = vsel %vm1421, %v1409, %v1020
      %v1443 = vsel %vm1421, %v1410, %v1022
      %v1444 = vsel %vm1421, %v1411, %v1024
      %v1445 = vsel %vm1421, %v1412, %v1026
      %v1446 = vsel %vm1421, %v1413, %v1028
      %v1447 = vsel %vm1421, %v1414, %v1030
      %v1448 = vsel %vm1421, %v1415, %v1032
      %v1449 = vsel %vm1421, %v1416, %v1034
      %v1450 = vsel %vm1421, %v1417, %v1036
      %v1451 = vsel %vm1421, %v1418, %v1038
      %v1452 = vsel %vm1421, %v1419, %v1040
      %v1453 = vsel %vm1421, %v1420, %v1040
      %vm1454 = vcmask 228352
      %v1455 = vsel %vm1454, %v1422, %v1073
      %v1456 = vsel %vm1454, %v1423, %v1075
      %v1457 = vsel %vm1454, %v1424, %v1077
      %v1458 = vsel %vm1454, %v1425, %v1079
      %v1459 = vsel %vm1454, %v1426, %v1081
      %v1460 = vsel %vm1454, %v1427, %v1083
      %v1461 = vsel %vm1454, %v1428, %v1085
      %v1462 = vsel %vm1454, %v1429, %v1087
      %v1463 = vsel %vm1454, %v1430, %v1089
      %v1464 = vsel %vm1454, %v1431, %v1091
      %v1465 = vsel %vm1454, %v1432, %v1093
      %v1466 = vsel %vm1454, %v1433, %v1095
      %v1467 = vsel %vm1454, %v1434, %v1097
      %v1468 = vsel %vm1454, %v1435, %v1099
      %v1469 = vsel %vm1454, %v1436, %v1101
      %v1470 = vsel %vm1454, %v1437, %v1103
      %v1471 = vsel %vm1454, %v1438, %v1105
      %v1472 = vsel %vm1454, %v1439, %v1107
      %v1473 = vsel %vm1454, %v1440, %v1109
      %v1474 = vsel %vm1454, %v1441, %v1111
      %v1475 = vsel %vm1454, %v1442, %v1113
      %v1476 = vsel %vm1454, %v1443, %v1115
      %v1477 = vsel %vm1454, %v1444, %v1117
      %v1478 = vsel %vm1454, %v1445, %v1119
      %v1479 = vsel %vm1454, %v1446, %v1121
      %v1480 = vsel %vm1454, %v1447, %v1123
      %v1481 = vsel %vm1454, %v1448, %v1125
      %v1482 = vsel %vm1454, %v1449, %v1127
      %v1483 = vsel %vm1454, %v1450, %v1129
      %v1484 = vsel %vm1454, %v1451, %v1131
      %v1485 = vsel %vm1454, %v1452, %v1133
      %v1486 = vsel %vm1454, %v1453, %v1133
      %vm1487 = vcmask 261120
      %v1488 = vsel %vm1487, %v1455, %v1166
      %v1489 = vsel %vm1487, %v1456, %v1168
      %v1490 = vsel %vm1487, %v1457, %v1170
      %v1491 = vsel %vm1487, %v1458, %v1172
      %v1492 = vsel %vm1487, %v1459, %v1174
      %v1493 = vsel %vm1487, %v1460, %v1176
      %v1494 = vsel %vm1487, %v1461, %v1178
      %v1495 = vsel %vm1487, %v1462, %v1180
      %v1496 = vsel %vm1487, %v1463, %v1182
      %v1497 = vsel %vm1487, %v1464, %v1184
      %v1498 = vsel %vm1487, %v1465, %v1186
      %v1499 = vsel %vm1487, %v1466, %v1188
      %v1500 = vsel %vm1487, %v1467, %v1190
      %v1501 = vsel %vm1487, %v1468, %v1192
      %v1502 = vsel %vm1487, %v1469, %v1194
      %v1503 = vsel %vm1487, %v1470, %v1196
      %v1504 = vsel %vm1487, %v1471, %v1198
      %v1505 = vsel %vm1487, %v1472, %v1200
      %v1506 = vsel %vm1487, %v1473, %v1202
      %v1507 = vsel %vm1487, %v1474, %v1204
      %v1508 = vsel %vm1487, %v1475, %v1206
      %v1509 = vsel %vm1487, %v1476, %v1208
      %v1510 = vsel %vm1487, %v1477, %v1210
      %v1511 = vsel %vm1487, %v1478, %v1212
      %v1512 = vsel %vm1487, %v1479, %v1214
      %v1513 = vsel %vm1487, %v1480, %v1216
      %v1514 = vsel %vm1487, %v1481, %v1218
      %v1515 = vsel %vm1487, %v1482, %v1220
      %v1516 = vsel %vm1487, %v1483, %v1222
      %v1517 = vsel %vm1487, %v1484, %v1224
      %v1518 = vsel %vm1487, %v1485, %v1226
      %v1519 = vsel %vm1487, %v1486, %v1226
      %v1521 = vlaneseq
      %v1522 = vshrl.u32 %v1521, 7
      %v1523 = vsub.s32 0, %v1522
      %v1524 = vrot.slane %v262, %v1523
      %vm1526 = vcmask 293888
      %v1528 = vsel %vm1526, %v1488, 0
      %v1531 = vsel %vm1526, %v1489, 0
      %v1534 = vsel %vm1526, %v1490, 0
      %v1537 = vsel %vm1526, %v1491, 0
      %v1540 = vsel %vm1526, %v1492, 0
      %v1543 = vsel %vm1526, %v1493, 0
      %v1546 = vsel %vm1526, %v1494, 0
      %v1549 = vsel %vm1526, %v1495, 0
      %v1552 = vsel %vm1526, %v1496, 0
      %v1555 = vsel %vm1526, %v1497, 0
      %v1558 = vsel %vm1526, %v1498, 0
      %v1561 = vsel %vm1526, %v1499, 0
      %v1564 = vsel %vm1526, %v1500, 0
      %v1567 = vsel %vm1526, %v1501, 0
      %v1570 = vsel %vm1526, %v1502, 0
      %v1573 = vsel %vm1526, %v1503, 0
      %v1576 = vsel %vm1526, %v1504, 0
      %v1579 = vsel %vm1526, %v1505, 0
      %v1582 = vsel %vm1526, %v1506, 0
      %v1585 = vsel %vm1526, %v1507, 0
      %v1588 = vsel %vm1526, %v1508, 0
      %v1591 = vsel %vm1526, %v1509, 0
      %v1594 = vsel %vm1526, %v1510, 0
      %v1597 = vsel %vm1526, %v1511, 0
      %v1600 = vsel %vm1526, %v1512, 0
      %v1603 = vsel %vm1526, %v1513, 0
      %v1606 = vsel %vm1526, %v1514, 0
      %v1609 = vsel %vm1526, %v1515, 0
      %v1612 = vsel %vm1526, %v1516, 0
      %v1615 = vsel %vm1526, %v1517, 0
      %v1618 = vsel %vm1526, %v1518, 0
      %v1621 = vsel %vm1526, %v1519, 0
      %vm1623 = vcmask 1043456
      %v1625 = vsel %vm1623, %v261, 0
      %1627 = vmatprep.subr.mxu0 0.0
      %1628 = vmatpush1.msra.mxu0 0.0
      %1629 = vmatprep.subr.mxu0 0.0
      %1630 = vmatpush1.msra.mxu0 0.0
      %1631 = vmatprep.subr.mxu0 0.0
      %1632 = vmatpush1.msra.mxu0 0.0
      %1633 = vmatprep.subr.mxu0 0.0
      %1634 = vmatpush1.msra.mxu0 0.0
      %1635 = vmatprep.subr.mxu0 0.0
      %1636 = vmatpush1.msra.mxu0 0.0
      %1637 = vmatprep.subr.mxu0 0.0
      %1638 = vmatpush1.msra.mxu0 0.0
      %1639 = vmatprep.subr.mxu0 0.0
      %1640 = vmatpush1.msra.mxu0 0.0
      %1641 = vmatprep.subr.mxu0 0.0
      %1642 = vmatpush1.msra.mxu0 0.0
      %1643 = vmatprep.subr.mxu0 0.0
      %1644 = vmatpush1.msra.mxu0 0.0
      %1645 = vmatprep.subr.mxu0 0.0
      %1646 = vmatpush1.msra.mxu0 0.0
      %1647 = vmatprep.subr.mxu0 0.0
      %1648 = vmatpush1.msra.mxu0 0.0
      %1649 = vmatprep.subr.mxu0 0.0
      %1650 = vmatpush1.msra.mxu0 %v1625
      %1651 = vmatprep.subr.mxu0 0.0
      %1652 = vmatpush1.msra.mxu0 %v260
      %1653 = vmatprep.subr.mxu0 0.0
      %1654 = vmatpush1.msra.mxu0 %v259
      %1655 = vmatprep.subr.mxu0 0.0
      %1656 = vmatpush1.msra.mxu0 %v258
      %1657 = vmatprep.subr.mxu0 0.0
      %1658 = vmatpush1.msra.mxu0 %v257
      %1659 = vmatprep.subr.mxu0 0.0
      %1660 = vmatpush2.msra.mxu0 0.0
      %1661 = vmatprep.subr.mxu0 0.0
      %1662 = vmatpush2.msra.mxu0 0.0
      %1663 = vmatprep.subr.mxu0 0.0
      %1664 = vmatpush2.msra.mxu0 0.0
      %1665 = vmatprep.subr.mxu0 0.0
      %1666 = vmatpush2.msra.mxu0 0.0
      %1667 = vmatprep.subr.mxu0 0.0
      %1668 = vmatpush2.msra.mxu0 0.0
      %1669 = vmatprep.subr.mxu0 0.0
      %1670 = vmatpush2.msra.mxu0 0.0
      %1671 = vmatprep.subr.mxu0 0.0
      %1672 = vmatpush2.msra.mxu0 0.0
      %1673 = vmatprep.subr.mxu0 0.0
      %1674 = vmatpush2.msra.mxu0 0.0
      %1675 = vmatprep.subr.mxu0 0.0
      %1676 = vmatpush2.msra.mxu0 0.0
      %1677 = vmatprep.subr.mxu0 0.0
      %1678 = vmatpush2.msra.mxu0 0.0
      %1679 = vmatprep.subr.mxu0 0.0
      %1680 = vmatpush2.msra.mxu0 0.0
      %1681 = vmatprep.subr.mxu0 0.0
      %1682 = vmatpush2.msra.mxu0 0.0
      %1683 = vmatprep.subr.mxu0 0.0
      %1684 = vmatpush2.msra.mxu0 0.0
      %1685 = vmatprep.subr.mxu0 0.0
      %1686 = vmatpush2.msra.mxu0 0.0
      %1687 = vmatprep.subr.mxu0 0.0
      %1688 = vmatpush2.msra.mxu0 0.0
      %1689 = vmatprep.subr.mxu0 0.0
      %1690 = vmatpush2.msra.mxu0 0.0
      %1691 = vmatprep.mubr.f32.mxu0 0.0
      %1692 = vmatmul.mubr.f32.gmra.mxu0 %v1528
      %v1693 = vpop.f32.mrf.mxu0
      %v1694 = vadd.f32 %v1524, %v1693
      %v1695 = vpop.f32.mrf.mxu0
      %1696 = vmatprep.mubr.f32.mxu0 0.0
      %1697 = vmatmul.mubr.f32.gmra.mxu0 %v1531
      %v1698 = vpop.f32.mrf.mxu0
      %v1699 = vadd.f32 %v1524, %v1698
      %v1700 = vpop.f32.mrf.mxu0
      %1701 = vmatprep.mubr.f32.mxu0 0.0
      %1702 = vmatmul.mubr.f32.gmra.mxu0 %v1534
      %v1703 = vpop.f32.mrf.mxu0
      %v1704 = vadd.f32 %v1524, %v1703
      %v1705 = vpop.f32.mrf.mxu0
      %1706 = vmatprep.mubr.f32.mxu0 0.0
      %1707 = vmatmul.mubr.f32.gmra.mxu0 %v1537
      %v1708 = vpop.f32.mrf.mxu0
      %v1709 = vadd.f32 %v1524, %v1708
      %v1710 = vpop.f32.mrf.mxu0
      %1711 = vmatprep.mubr.f32.mxu0 0.0
      %1712 = vmatmul.mubr.f32.gmra.mxu0 %v1540
      %v1713 = vpop.f32.mrf.mxu0
      %v1714 = vadd.f32 %v1524, %v1713
      %v1715 = vpop.f32.mrf.mxu0
      %1716 = vmatprep.mubr.f32.mxu0 0.0
      %1717 = vmatmul.mubr.f32.gmra.mxu0 %v1543
      %v1718 = vpop.f32.mrf.mxu0
      %v1719 = vadd.f32 %v1524, %v1718
      %v1720 = vpop.f32.mrf.mxu0
      %1721 = vmatprep.mubr.f32.mxu0 0.0
      %1722 = vmatmul.mubr.f32.gmra.mxu0 %v1546
      %v1723 = vpop.f32.mrf.mxu0
      %v1724 = vadd.f32 %v1524, %v1723
      %v1725 = vpop.f32.mrf.mxu0
      %1726 = vmatprep.mubr.f32.mxu0 0.0
      %1727 = vmatmul.mubr.f32.gmra.mxu0 %v1549
      %v1728 = vpop.f32.mrf.mxu0
      %v1729 = vadd.f32 %v1524, %v1728
      %v1730 = vpop.f32.mrf.mxu0
      %1731 = vmatprep.mubr.f32.mxu0 0.0
      %1732 = vmatmul.mubr.f32.gmra.mxu0 %v1552
      %v1733 = vpop.f32.mrf.mxu0
      %v1734 = vadd.f32 %v1524, %v1733
      %v1735 = vpop.f32.mrf.mxu0
      %1736 = vmatprep.mubr.f32.mxu0 0.0
      %1737 = vmatmul.mubr.f32.gmra.mxu0 %v1555
      %v1738 = vpop.f32.mrf.mxu0
      %v1739 = vadd.f32 %v1524, %v1738
      %v1740 = vpop.f32.mrf.mxu0
      %1741 = vmatprep.mubr.f32.mxu0 0.0
      %1742 = vmatmul.mubr.f32.gmra.mxu0 %v1558
      %v1743 = vpop.f32.mrf.mxu0
      %v1744 = vadd.f32 %v1524, %v1743
      %v1745 = vpop.f32.mrf.mxu0
      %1746 = vmatprep.mubr.f32.mxu0 0.0
      %1747 = vmatmul.mubr.f32.gmra.mxu0 %v1561
      %v1748 = vpop.f32.mrf.mxu0
      %v1749 = vadd.f32 %v1524, %v1748
      %v1750 = vpop.f32.mrf.mxu0
      %1751 = vmatprep.mubr.f32.mxu0 0.0
      %1752 = vmatmul.mubr.f32.gmra.mxu0 %v1564
      %v1753 = vpop.f32.mrf.mxu0
      %v1754 = vadd.f32 %v1524, %v1753
      %v1755 = vpop.f32.mrf.mxu0
      %1756 = vmatprep.mubr.f32.mxu0 0.0
      %1757 = vmatmul.mubr.f32.gmra.mxu0 %v1567
      %v1758 = vpop.f32.mrf.mxu0
      %v1759 = vadd.f32 %v1524, %v1758
      %v1760 = vpop.f32.mrf.mxu0
      %1761 = vmatprep.mubr.f32.mxu0 0.0
      %1762 = vmatmul.mubr.f32.gmra.mxu0 %v1570
      %v1763 = vpop.f32.mrf.mxu0
      %v1764 = vadd.f32 %v1524, %v1763
      %v1765 = vpop.f32.mrf.mxu0
      %1766 = vmatprep.mubr.f32.mxu0 0.0
      %1767 = vmatmul.mubr.f32.gmra.mxu0 %v1573
      %v1768 = vpop.f32.mrf.mxu0
      %v1769 = vadd.f32 %v1524, %v1768
      %v1770 = vpop.f32.mrf.mxu0
      %1771 = vmatprep.mubr.f32.mxu0 0.0
      %1772 = vmatmul.mubr.f32.gmra.mxu0 %v1576
      %v1773 = vpop.f32.mrf.mxu0
      %v1774 = vadd.f32 %v1524, %v1773
      %v1775 = vpop.f32.mrf.mxu0
      %1776 = vmatprep.mubr.f32.mxu0 0.0
      %1777 = vmatmul.mubr.f32.gmra.mxu0 %v1579
      %v1778 = vpop.f32.mrf.mxu0
      %v1779 = vadd.f32 %v1524, %v1778
      %v1780 = vpop.f32.mrf.mxu0
      %1781 = vmatprep.mubr.f32.mxu0 0.0
      %1782 = vmatmul.mubr.f32.gmra.mxu0 %v1582
      %v1783 = vpop.f32.mrf.mxu0
      %v1784 = vadd.f32 %v1524, %v1783
      %v1785 = vpop.f32.mrf.mxu0
      %1786 = vmatprep.mubr.f32.mxu0 0.0
      %1787 = vmatmul.mubr.f32.gmra.mxu0 %v1585
      %v1788 = vpop.f32.mrf.mxu0
      %v1789 = vadd.f32 %v1524, %v1788
      %v1790 = vpop.f32.mrf.mxu0
      %1791 = vmatprep.mubr.f32.mxu0 0.0
      %1792 = vmatmul.mubr.f32.gmra.mxu0 %v1588
      %v1793 = vpop.f32.mrf.mxu0
      %v1794 = vadd.f32 %v1524, %v1793
      %v1795 = vpop.f32.mrf.mxu0
      %1796 = vmatprep.mubr.f32.mxu0 0.0
      %1797 = vmatmul.mubr.f32.gmra.mxu0 %v1591
      %v1798 = vpop.f32.mrf.mxu0
      %v1799 = vadd.f32 %v1524, %v1798
      %v1800 = vpop.f32.mrf.mxu0
      %1801 = vmatprep.mubr.f32.mxu0 0.0
      %1802 = vmatmul.mubr.f32.gmra.mxu0 %v1594
      %v1803 = vpop.f32.mrf.mxu0
      %v1804 = vadd.f32 %v1524, %v1803
      %v1805 = vpop.f32.mrf.mxu0
      %1806 = vmatprep.mubr.f32.mxu0 0.0
      %1807 = vmatmul.mubr.f32.gmra.mxu0 %v1597
      %v1808 = vpop.f32.mrf.mxu0
      %v1809 = vadd.f32 %v1524, %v1808
      %v1810 = vpop.f32.mrf.mxu0
      %1811 = vmatprep.mubr.f32.mxu0 0.0
      %1812 = vmatmul.mubr.f32.gmra.mxu0 %v1600
      %v1813 = vpop.f32.mrf.mxu0
      %v1814 = vadd.f32 %v1524, %v1813
      %v1815 = vpop.f32.mrf.mxu0
      %1816 = vmatprep.mubr.f32.mxu0 0.0
      %1817 = vmatmul.mubr.f32.gmra.mxu0 %v1603
      %v1818 = vpop.f32.mrf.mxu0
      %v1819 = vadd.f32 %v1524, %v1818
      %v1820 = vpop.f32.mrf.mxu0
      %1821 = vmatprep.mubr.f32.mxu0 0.0
      %1822 = vmatmul.mubr.f32.gmra.mxu0 %v1606
      %v1823 = vpop.f32.mrf.mxu0
      %v1824 = vadd.f32 %v1524, %v1823
      %v1825 = vpop.f32.mrf.mxu0
      %1826 = vmatprep.mubr.f32.mxu0 0.0
      %1827 = vmatmul.mubr.f32.gmra.mxu0 %v1609
      %v1828 = vpop.f32.mrf.mxu0
      %v1829 = vadd.f32 %v1524, %v1828
      %v1830 = vpop.f32.mrf.mxu0
      %1831 = vmatprep.mubr.f32.mxu0 0.0
      %1832 = vmatmul.mubr.f32.gmra.mxu0 %v1612
      %v1833 = vpop.f32.mrf.mxu0
      %v1834 = vadd.f32 %v1524, %v1833
      %v1835 = vpop.f32.mrf.mxu0
      %1836 = vmatprep.mubr.f32.mxu0 0.0
      %1837 = vmatmul.mubr.f32.gmra.mxu0 %v1615
      %v1838 = vpop.f32.mrf.mxu0
      %v1839 = vadd.f32 %v1524, %v1838
      %v1840 = vpop.f32.mrf.mxu0
      %1841 = vmatprep.mubr.f32.mxu0 0.0
      %1842 = vmatmul.mubr.f32.gmra.mxu0 %v1618
      %v1843 = vpop.f32.mrf.mxu0
      %v1844 = vadd.f32 %v1524, %v1843
      %v1845 = vpop.f32.mrf.mxu0
      %1846 = vmatprep.mubr.f32.mxu0 0.0
      %1847 = vmatmul.mubr.f32.gmra.mxu0 %v1621
      %v1848 = vpop.f32.mrf.mxu0
      %v1849 = vadd.f32 %v1524, %v1848
      %v1850 = vpop.f32.mrf.mxu0
      %1851 = vdwg.mxu0
      %v1852 = vmax.f32 %v1694, 0.0
      %v1853 = vmax.f32 %v1699, 0.0
      %v1854 = vmax.f32 %v1704, 0.0
      %v1855 = vmax.f32 %v1709, 0.0
      %v1856 = vmax.f32 %v1714, 0.0
      %v1857 = vmax.f32 %v1719, 0.0
      %v1858 = vmax.f32 %v1724, 0.0
      %v1859 = vmax.f32 %v1729, 0.0
      %v1860 = vmax.f32 %v1734, 0.0
      %v1861 = vmax.f32 %v1739, 0.0
      %v1862 = vmax.f32 %v1744, 0.0
      %v1863 = vmax.f32 %v1749, 0.0
      %v1864 = vmax.f32 %v1754, 0.0
      %v1865 = vmax.f32 %v1759, 0.0
      %v1866 = vmax.f32 %v1764, 0.0
      %v1867 = vmax.f32 %v1769, 0.0
      %v1868 = vmax.f32 %v1774, 0.0
      %v1869 = vmax.f32 %v1779, 0.0
      %v1870 = vmax.f32 %v1784, 0.0
      %v1871 = vmax.f32 %v1789, 0.0
      %v1872 = vmax.f32 %v1794, 0.0
      %v1873 = vmax.f32 %v1799, 0.0
      %v1874 = vmax.f32 %v1804, 0.0
      %v1875 = vmax.f32 %v1809, 0.0
      %v1876 = vmax.f32 %v1814, 0.0
      %v1877 = vmax.f32 %v1819, 0.0
      %v1878 = vmax.f32 %v1824, 0.0
      %v1879 = vmax.f32 %v1829, 0.0
      %v1880 = vmax.f32 %v1834, 0.0
      %v1881 = vmax.f32 %v1839, 0.0
      %v1882 = vmax.f32 %v1844, 0.0
      %v1883 = vmax.f32 %v1849, 0.0
      %v1884 = vld [vmem:[%s3] sm:$0xff]
      %v1885 = vld [vmem:[%s3 + $0x8] sm:$0xff]
      %v1886 = vld [vmem:[%s3 + $0x10] sm:$0xff]
      %v1887 = vld [vmem:[%s3 + $0x18] sm:$0xff]
      %v1888 = vld [vmem:[%s3 + $0x20] sm:$0xff]
      %v1889 = vld [vmem:[%s3 + $0x28] sm:$0xff]
      %v1890 = vld [vmem:[%s3 + $0x30] sm:$0xff]
      %v1891 = vld [vmem:[%s3 + $0x38] sm:$0xff]
      %v1892 = vld [vmem:[%s3 + $0x40] sm:$0xff]
      %v1893 = vld [vmem:[%s4] sm:$0x1]
      %v1926 = vrot.slane %v1852, 7
      %v1927 = vrot.slane %v1853, 7
      %v1928 = vsel %vm295, %v1926, %v1927
      %v1929 = vrot.slane %v1854, 7
      %v1930 = vrot.slane %v1855, 7
      %v1931 = vsel %vm295, %v1929, %v1930
      %v1932 = vrot.slane %v1856, 7
      %v1933 = vrot.slane %v1857, 7
      %v1934 = vsel %vm295, %v1932, %v1933
      %v1935 = vrot.slane %v1858, 7
      %v1936 = vrot.slane %v1859, 7
      %v1937 = vsel %vm295, %v1935, %v1936
      %v1938 = vrot.slane %v1860, 7
      %v1939 = vrot.slane %v1861, 7
      %v1940 = vsel %vm295, %v1938, %v1939
      %v1941 = vrot.slane %v1862, 7
      %v1942 = vrot.slane %v1863, 7
      %v1943 = vsel %vm295, %v1941, %v1942
      %v1944 = vrot.slane %v1864, 7
      %v1945 = vrot.slane %v1865, 7
      %v1946 = vsel %vm295, %v1944, %v1945
      %v1947 = vrot.slane %v1866, 7
      %v1948 = vrot.slane %v1867, 7
      %v1949 = vsel %vm295, %v1947, %v1948
      %v1950 = vrot.slane %v1868, 7
      %v1951 = vrot.slane %v1869, 7
      %v1952 = vsel %vm295, %v1950, %v1951
      %v1953 = vrot.slane %v1870, 7
      %v1954 = vrot.slane %v1871, 7
      %v1955 = vsel %vm295, %v1953, %v1954
      %v1956 = vrot.slane %v1872, 7
      %v1957 = vrot.slane %v1873, 7
      %v1958 = vsel %vm295, %v1956, %v1957
      %v1959 = vrot.slane %v1874, 7
      %v1960 = vrot.slane %v1875, 7
      %v1961 = vsel %vm295, %v1959, %v1960
      %v1962 = vrot.slane %v1876, 7
      %v1963 = vrot.slane %v1877, 7
      %v1964 = vsel %vm295, %v1962, %v1963
      %v1965 = vrot.slane %v1878, 7
      %v1966 = vrot.slane %v1879, 7
      %v1967 = vsel %vm295, %v1965, %v1966
      %v1968 = vrot.slane %v1880, 7
      %v1969 = vrot.slane %v1881, 7
      %v1970 = vsel %vm295, %v1968, %v1969
      %v1971 = vrot.slane %v1882, 7
      %v1972 = vrot.slane %v1883, 7
      %v1973 = vsel %vm295, %v1971, %v1972
      %v2005 = vsel %vm295, 0.0, %v1926
      %v2006 = vsel %vm295, 0.0, %v1929
      %v2007 = vsel %vm295, 0.0, %v1932
      %v2008 = vsel %vm295, 0.0, %v1935
      %v2009 = vsel %vm295, 0.0, %v1938
      %v2010 = vsel %vm295, 0.0, %v1941
      %v2011 = vsel %vm295, 0.0, %v1944
      %v2012 = vsel %vm295, 0.0, %v1947
      %v2013 = vsel %vm295, 0.0, %v1950
      %v2014 = vsel %vm295, 0.0, %v1953
      %v2015 = vsel %vm295, 0.0, %v1956
      %v2016 = vsel %vm295, 0.0, %v1959
      %v2017 = vsel %vm295, 0.0, %v1962
      %v2018 = vsel %vm295, 0.0, %v1965
      %v2019 = vsel %vm295, 0.0, %v1968
      %v2020 = vsel %vm295, 0.0, %v1971
      %v2021 = vrot.slane %v1852, 1
      %v2022 = vrot.slane %v1853, 1
      %v2023 = vsel %vm391, %v2021, %v2022
      %v2024 = vrot.slane %v1854, 1
      %v2025 = vrot.slane %v1855, 1
      %v2026 = vsel %vm391, %v2024, %v2025
      %v2027 = vrot.slane %v1856, 1
      %v2028 = vrot.slane %v1857, 1
      %v2029 = vsel %vm391, %v2027, %v2028
      %v2030 = vrot.slane %v1858, 1
      %v2031 = vrot.slane %v1859, 1
      %v2032 = vsel %vm391, %v2030, %v2031
      %v2033 = vrot.slane %v1860, 1
      %v2034 = vrot.slane %v1861, 1
      %v2035 = vsel %vm391, %v2033, %v2034
      %v2036 = vrot.slane %v1862, 1
      %v2037 = vrot.slane %v1863, 1
      %v2038 = vsel %vm391, %v2036, %v2037
      %v2039 = vrot.slane %v1864, 1
      %v2040 = vrot.slane %v1865, 1
      %v2041 = vsel %vm391, %v2039, %v2040
      %v2042 = vrot.slane %v1866, 1
      %v2043 = vrot.slane %v1867, 1
      %v2044 = vsel %vm391, %v2042, %v2043
      %v2045 = vrot.slane %v1868, 1
      %v2046 = vrot.slane %v1869, 1
      %v2047 = vsel %vm391, %v2045, %v2046
      %v2048 = vrot.slane %v1870, 1
      %v2049 = vrot.slane %v1871, 1
      %v2050 = vsel %vm391, %v2048, %v2049
      %v2051 = vrot.slane %v1872, 1
      %v2052 = vrot.slane %v1873, 1
      %v2053 = vsel %vm391, %v2051, %v2052
      %v2054 = vrot.slane %v1874, 1
      %v2055 = vrot.slane %v1875, 1
      %v2056 = vsel %vm391, %v2054, %v2055
      %v2057 = vrot.slane %v1876, 1
      %v2058 = vrot.slane %v1877, 1
      %v2059 = vsel %vm391, %v2057, %v2058
      %v2060 = vrot.slane %v1878, 1
      %v2061 = vrot.slane %v1879, 1
      %v2062 = vsel %vm391, %v2060, %v2061
      %v2063 = vrot.slane %v1880, 1
      %v2064 = vrot.slane %v1881, 1
      %v2065 = vsel %vm391, %v2063, %v2064
      %v2066 = vrot.slane %v1882, 1
      %v2067 = vrot.slane %v1883, 1
      %v2068 = vsel %vm391, %v2066, %v2067
      %v2085 = vsel %vm391, %v2022, 0.0
      %v2086 = vsel %vm391, %v2025, 0.0
      %v2087 = vsel %vm391, %v2028, 0.0
      %v2088 = vsel %vm391, %v2031, 0.0
      %v2089 = vsel %vm391, %v2034, 0.0
      %v2090 = vsel %vm391, %v2037, 0.0
      %v2091 = vsel %vm391, %v2040, 0.0
      %v2092 = vsel %vm391, %v2043, 0.0
      %v2093 = vsel %vm391, %v2046, 0.0
      %v2094 = vsel %vm391, %v2049, 0.0
      %v2095 = vsel %vm391, %v2052, 0.0
      %v2096 = vsel %vm391, %v2055, 0.0
      %v2097 = vsel %vm391, %v2058, 0.0
      %v2098 = vsel %vm391, %v2061, 0.0
      %v2099 = vsel %vm391, %v2064, 0.0
      %v2100 = vsel %vm391, %v2067, 0.0
      %2101 = vrot.lane.b32.xlu0 %v1852, 8
      %v2102 = vpop.permute.xlu0 %2101
      %2103 = vrot.lane.b32.xlu0 %v1853, 8
      %v2104 = vpop.permute.xlu0 %2103
      %2105 = vrot.lane.b32.xlu0 %v1854, 8
      %v2106 = vpop.permute.xlu0 %2105
      %2107 = vrot.lane.b32.xlu0 %v1855, 8
      %v2108 = vpop.permute.xlu0 %2107
      %2109 = vrot.lane.b32.xlu0 %v1856, 8
      %v2110 = vpop.permute.xlu0 %2109
      %2111 = vrot.lane.b32.xlu0 %v1857, 8
      %v2112 = vpop.permute.xlu0 %2111
      %2113 = vrot.lane.b32.xlu0 %v1858, 8
      %v2114 = vpop.permute.xlu0 %2113
      %2115 = vrot.lane.b32.xlu0 %v1859, 8
      %v2116 = vpop.permute.xlu0 %2115
      %2117 = vrot.lane.b32.xlu0 %v1860, 8
      %v2118 = vpop.permute.xlu0 %2117
      %2119 = vrot.lane.b32.xlu0 %v1861, 8
      %v2120 = vpop.permute.xlu0 %2119
      %2121 = vrot.lane.b32.xlu0 %v1862, 8
      %v2122 = vpop.permute.xlu0 %2121
      %2123 = vrot.lane.b32.xlu0 %v1863, 8
      %v2124 = vpop.permute.xlu0 %2123
      %2125 = vrot.lane.b32.xlu0 %v1864, 8
      %v2126 = vpop.permute.xlu0 %2125
      %2127 = vrot.lane.b32.xlu0 %v1865, 8
      %v2128 = vpop.permute.xlu0 %2127
      %2129 = vrot.lane.b32.xlu0 %v1866, 8
      %v2130 = vpop.permute.xlu0 %2129
      %2131 = vrot.lane.b32.xlu0 %v1867, 8
      %v2132 = vpop.permute.xlu0 %2131
      %2133 = vrot.lane.b32.xlu0 %v1868, 8
      %v2134 = vpop.permute.xlu0 %2133
      %2135 = vrot.lane.b32.xlu0 %v1869, 8
      %v2136 = vpop.permute.xlu0 %2135
      %2137 = vrot.lane.b32.xlu0 %v1870, 8
      %v2138 = vpop.permute.xlu0 %2137
      %2139 = vrot.lane.b32.xlu0 %v1871, 8
      %v2140 = vpop.permute.xlu0 %2139
      %2141 = vrot.lane.b32.xlu0 %v1872, 8
      %v2142 = vpop.permute.xlu0 %2141
      %2143 = vrot.lane.b32.xlu0 %v1873, 8
      %v2144 = vpop.permute.xlu0 %2143
      %2145 = vrot.lane.b32.xlu0 %v1874, 8
      %v2146 = vpop.permute.xlu0 %2145
      %2147 = vrot.lane.b32.xlu0 %v1875, 8
      %v2148 = vpop.permute.xlu0 %2147
      %2149 = vrot.lane.b32.xlu0 %v1876, 8
      %v2150 = vpop.permute.xlu0 %2149
      %2151 = vrot.lane.b32.xlu0 %v1877, 8
      %v2152 = vpop.permute.xlu0 %2151
      %2153 = vrot.lane.b32.xlu0 %v1878, 8
      %v2154 = vpop.permute.xlu0 %2153
      %2155 = vrot.lane.b32.xlu0 %v1879, 8
      %v2156 = vpop.permute.xlu0 %2155
      %2157 = vrot.lane.b32.xlu0 %v1880, 8
      %v2158 = vpop.permute.xlu0 %2157
      %2159 = vrot.lane.b32.xlu0 %v1881, 8
      %v2160 = vpop.permute.xlu0 %2159
      %2206 = vrot.lane.b32.xlu0 0.0, 16
      %v2207 = vpop.permute.xlu0 %2206
      %2208 = vrot.lane.b32.xlu0 %v2023, 16
      %v2209 = vpop.permute.xlu0 %2208
      %2210 = vrot.lane.b32.xlu0 %v2085, 16
      %v2211 = vpop.permute.xlu0 %2210
      %2212 = vrot.lane.b32.xlu0 %v2026, 16
      %v2213 = vpop.permute.xlu0 %2212
      %2214 = vrot.lane.b32.xlu0 %v2086, 16
      %v2215 = vpop.permute.xlu0 %2214
      %2216 = vrot.lane.b32.xlu0 %v2029, 16
      %v2217 = vpop.permute.xlu0 %2216
      %2218 = vrot.lane.b32.xlu0 %v2087, 16
      %v2219 = vpop.permute.xlu0 %2218
      %2220 = vrot.lane.b32.xlu0 %v2032, 16
      %v2221 = vpop.permute.xlu0 %2220
      %2222 = vrot.lane.b32.xlu0 %v2088, 16
      %v2223 = vpop.permute.xlu0 %2222
      %2224 = vrot.lane.b32.xlu0 %v2035, 16
      %v2225 = vpop.permute.xlu0 %2224
      %2226 = vrot.lane.b32.xlu0 %v2089, 16
      %v2227 = vpop.permute.xlu0 %2226
      %2228 = vrot.lane.b32.xlu0 %v2038, 16
      %v2229 = vpop.permute.xlu0 %2228
      %2230 = vrot.lane.b32.xlu0 %v2090, 16
      %v2231 = vpop.permute.xlu0 %2230
      %2232 = vrot.lane.b32.xlu0 %v2041, 16
      %v2233 = vpop.permute.xlu0 %2232
      %2234 = vrot.lane.b32.xlu0 %v2091, 16
      %v2235 = vpop.permute.xlu0 %2234
      %2236 = vrot.lane.b32.xlu0 %v2044, 16
      %v2237 = vpop.permute.xlu0 %2236
      %2238 = vrot.lane.b32.xlu0 %v2092, 16
      %v2239 = vpop.permute.xlu0 %2238
      %2240 = vrot.lane.b32.xlu0 %v2047, 16
      %v2241 = vpop.permute.xlu0 %2240
      %2242 = vrot.lane.b32.xlu0 %v2093, 16
      %v2243 = vpop.permute.xlu0 %2242
      %2244 = vrot.lane.b32.xlu0 %v2050, 16
      %v2245 = vpop.permute.xlu0 %2244
      %2246 = vrot.lane.b32.xlu0 %v2094, 16
      %v2247 = vpop.permute.xlu0 %2246
      %2248 = vrot.lane.b32.xlu0 %v2053, 16
      %v2249 = vpop.permute.xlu0 %2248
      %2250 = vrot.lane.b32.xlu0 %v2095, 16
      %v2251 = vpop.permute.xlu0 %2250
      %2252 = vrot.lane.b32.xlu0 %v2056, 16
      %v2253 = vpop.permute.xlu0 %2252
      %2254 = vrot.lane.b32.xlu0 %v2096, 16
      %v2255 = vpop.permute.xlu0 %2254
      %2256 = vrot.lane.b32.xlu0 %v2059, 16
      %v2257 = vpop.permute.xlu0 %2256
      %2258 = vrot.lane.b32.xlu0 %v2097, 16
      %v2259 = vpop.permute.xlu0 %2258
      %2260 = vrot.lane.b32.xlu0 %v2062, 16
      %v2261 = vpop.permute.xlu0 %2260
      %2262 = vrot.lane.b32.xlu0 %v2098, 16
      %v2263 = vpop.permute.xlu0 %2262
      %2264 = vrot.lane.b32.xlu0 %v2065, 16
      %v2265 = vpop.permute.xlu0 %2264
      %2266 = vrot.lane.b32.xlu0 %v2099, 16
      %v2267 = vpop.permute.xlu0 %2266
      %2315 = vrot.lane.b32.xlu0 %v2005, 24
      %v2316 = vpop.permute.xlu0 %2315
      %2317 = vrot.lane.b32.xlu0 %v1928, 24
      %v2318 = vpop.permute.xlu0 %2317
      %2319 = vrot.lane.b32.xlu0 %v2006, 24
      %v2320 = vpop.permute.xlu0 %2319
      %2321 = vrot.lane.b32.xlu0 %v1931, 24
      %v2322 = vpop.permute.xlu0 %2321
      %2323 = vrot.lane.b32.xlu0 %v2007, 24
      %v2324 = vpop.permute.xlu0 %2323
      %2325 = vrot.lane.b32.xlu0 %v1934, 24
      %v2326 = vpop.permute.xlu0 %2325
      %2327 = vrot.lane.b32.xlu0 %v2008, 24
      %v2328 = vpop.permute.xlu0 %2327
      %2329 = vrot.lane.b32.xlu0 %v1937, 24
      %v2330 = vpop.permute.xlu0 %2329
      %2331 = vrot.lane.b32.xlu0 %v2009, 24
      %v2332 = vpop.permute.xlu0 %2331
      %2333 = vrot.lane.b32.xlu0 %v1940, 24
      %v2334 = vpop.permute.xlu0 %2333
      %2335 = vrot.lane.b32.xlu0 %v2010, 24
      %v2336 = vpop.permute.xlu0 %2335
      %2337 = vrot.lane.b32.xlu0 %v1943, 24
      %v2338 = vpop.permute.xlu0 %2337
      %2339 = vrot.lane.b32.xlu0 %v2011, 24
      %v2340 = vpop.permute.xlu0 %2339
      %2341 = vrot.lane.b32.xlu0 %v1946, 24
      %v2342 = vpop.permute.xlu0 %2341
      %2343 = vrot.lane.b32.xlu0 %v2012, 24
      %v2344 = vpop.permute.xlu0 %2343
      %2345 = vrot.lane.b32.xlu0 %v1949, 24
      %v2346 = vpop.permute.xlu0 %2345
      %2347 = vrot.lane.b32.xlu0 %v2013, 24
      %v2348 = vpop.permute.xlu0 %2347
      %2349 = vrot.lane.b32.xlu0 %v1952, 24
      %v2350 = vpop.permute.xlu0 %2349
      %2351 = vrot.lane.b32.xlu0 %v2014, 24
      %v2352 = vpop.permute.xlu0 %2351
      %2353 = vrot.lane.b32.xlu0 %v1955, 24
      %v2354 = vpop.permute.xlu0 %2353
      %2355 = vrot.lane.b32.xlu0 %v2015, 24
      %v2356 = vpop.permute.xlu0 %2355
      %2357 = vrot.lane.b32.xlu0 %v1958, 24
      %v2358 = vpop.permute.xlu0 %2357
      %2359 = vrot.lane.b32.xlu0 %v2016, 24
      %v2360 = vpop.permute.xlu0 %2359
      %2361 = vrot.lane.b32.xlu0 %v1961, 24
      %v2362 = vpop.permute.xlu0 %2361
      %2363 = vrot.lane.b32.xlu0 %v2017, 24
      %v2364 = vpop.permute.xlu0 %2363
      %2365 = vrot.lane.b32.xlu0 %v1964, 24
      %v2366 = vpop.permute.xlu0 %2365
      %2367 = vrot.lane.b32.xlu0 %v2018, 24
      %v2368 = vpop.permute.xlu0 %2367
      %2369 = vrot.lane.b32.xlu0 %v1967, 24
      %v2370 = vpop.permute.xlu0 %2369
      %2371 = vrot.lane.b32.xlu0 %v2019, 24
      %v2372 = vpop.permute.xlu0 %2371
      %2373 = vrot.lane.b32.xlu0 %v1970, 24
      %v2374 = vpop.permute.xlu0 %2373
      %2375 = vrot.lane.b32.xlu0 %v2020, 24
      %v2376 = vpop.permute.xlu0 %2375
      %2377 = vrot.lane.b32.xlu0 %v1973, 24
      %v2378 = vpop.permute.xlu0 %2377
      %2411 = vrot.lane.b32.xlu0 %v1852, 32
      %v2412 = vpop.permute.xlu0 %2411
      %2413 = vrot.lane.b32.xlu0 %v1853, 32
      %v2414 = vpop.permute.xlu0 %2413
      %2415 = vrot.lane.b32.xlu0 %v1854, 32
      %v2416 = vpop.permute.xlu0 %2415
      %2417 = vrot.lane.b32.xlu0 %v1855, 32
      %v2418 = vpop.permute.xlu0 %2417
      %2419 = vrot.lane.b32.xlu0 %v1856, 32
      %v2420 = vpop.permute.xlu0 %2419
      %2421 = vrot.lane.b32.xlu0 %v1857, 32
      %v2422 = vpop.permute.xlu0 %2421
      %2423 = vrot.lane.b32.xlu0 %v1858, 32
      %v2424 = vpop.permute.xlu0 %2423
      %2425 = vrot.lane.b32.xlu0 %v1859, 32
      %v2426 = vpop.permute.xlu0 %2425
      %2427 = vrot.lane.b32.xlu0 %v1860, 32
      %v2428 = vpop.permute.xlu0 %2427
      %2429 = vrot.lane.b32.xlu0 %v1861, 32
      %v2430 = vpop.permute.xlu0 %2429
      %2431 = vrot.lane.b32.xlu0 %v1862, 32
      %v2432 = vpop.permute.xlu0 %2431
      %2433 = vrot.lane.b32.xlu0 %v1863, 32
      %v2434 = vpop.permute.xlu0 %2433
      %2435 = vrot.lane.b32.xlu0 %v1864, 32
      %v2436 = vpop.permute.xlu0 %2435
      %2437 = vrot.lane.b32.xlu0 %v1865, 32
      %v2438 = vpop.permute.xlu0 %2437
      %2439 = vrot.lane.b32.xlu0 %v1866, 32
      %v2440 = vpop.permute.xlu0 %2439
      %2441 = vrot.lane.b32.xlu0 %v1867, 32
      %v2442 = vpop.permute.xlu0 %2441
      %2443 = vrot.lane.b32.xlu0 %v1868, 32
      %v2444 = vpop.permute.xlu0 %2443
      %2445 = vrot.lane.b32.xlu0 %v1869, 32
      %v2446 = vpop.permute.xlu0 %2445
      %2447 = vrot.lane.b32.xlu0 %v1870, 32
      %v2448 = vpop.permute.xlu0 %2447
      %2449 = vrot.lane.b32.xlu0 %v1871, 32
      %v2450 = vpop.permute.xlu0 %2449
      %2451 = vrot.lane.b32.xlu0 %v1872, 32
      %v2452 = vpop.permute.xlu0 %2451
      %2453 = vrot.lane.b32.xlu0 %v1873, 32
      %v2454 = vpop.permute.xlu0 %2453
      %2455 = vrot.lane.b32.xlu0 %v1874, 32
      %v2456 = vpop.permute.xlu0 %2455
      %2457 = vrot.lane.b32.xlu0 %v1875, 32
      %v2458 = vpop.permute.xlu0 %2457
      %2459 = vrot.lane.b32.xlu0 %v1876, 32
      %v2460 = vpop.permute.xlu0 %2459
      %2461 = vrot.lane.b32.xlu0 %v1877, 32
      %v2462 = vpop.permute.xlu0 %2461
      %2463 = vrot.lane.b32.xlu0 %v1878, 32
      %v2464 = vpop.permute.xlu0 %2463
      %2465 = vrot.lane.b32.xlu0 %v1879, 32
      %v2466 = vpop.permute.xlu0 %2465
      %2467 = vrot.lane.b32.xlu0 %v1880, 32
      %v2468 = vpop.permute.xlu0 %2467
      %2469 = vrot.lane.b32.xlu0 %v1881, 32
      %v2470 = vpop.permute.xlu0 %2469
      %2471 = vrot.lane.b32.xlu0 %v1882, 32
      %v2472 = vpop.permute.xlu0 %2471
      %2473 = vrot.lane.b32.xlu0 %v1883, 32
      %v2474 = vpop.permute.xlu0 %2473
      %2508 = vrot.lane.b32.xlu0 %v2023, 40
      %v2509 = vpop.permute.xlu0 %2508
      %2510 = vrot.lane.b32.xlu0 %v2085, 40
      %v2511 = vpop.permute.xlu0 %2510
      %2512 = vrot.lane.b32.xlu0 %v2026, 40
      %v2513 = vpop.permute.xlu0 %2512
      %2514 = vrot.lane.b32.xlu0 %v2086, 40
      %v2515 = vpop.permute.xlu0 %2514
      %2516 = vrot.lane.b32.xlu0 %v2029, 40
      %v2517 = vpop.permute.xlu0 %2516
      %2518 = vrot.lane.b32.xlu0 %v2087, 40
      %v2519 = vpop.permute.xlu0 %2518
      %2520 = vrot.lane.b32.xlu0 %v2032, 40
      %v2521 = vpop.permute.xlu0 %2520
      %2522 = vrot.lane.b32.xlu0 %v2088, 40
      %v2523 = vpop.permute.xlu0 %2522
      %2524 = vrot.lane.b32.xlu0 %v2035, 40
      %v2525 = vpop.permute.xlu0 %2524
      %2526 = vrot.lane.b32.xlu0 %v2089, 40
      %v2527 = vpop.permute.xlu0 %2526
      %2528 = vrot.lane.b32.xlu0 %v2038, 40
      %v2529 = vpop.permute.xlu0 %2528
      %2530 = vrot.lane.b32.xlu0 %v2090, 40
      %v2531 = vpop.permute.xlu0 %2530
      %2532 = vrot.lane.b32.xlu0 %v2041, 40
      %v2533 = vpop.permute.xlu0 %2532
      %2534 = vrot.lane.b32.xlu0 %v2091, 40
      %v2535 = vpop.permute.xlu0 %2534
      %2536 = vrot.lane.b32.xlu0 %v2044, 40
      %v2537 = vpop.permute.xlu0 %2536
      %2538 = vrot.lane.b32.xlu0 %v2092, 40
      %v2539 = vpop.permute.xlu0 %2538
      %2540 = vrot.lane.b32.xlu0 %v2047, 40
      %v2541 = vpop.permute.xlu0 %2540
      %2542 = vrot.lane.b32.xlu0 %v2093, 40
      %v2543 = vpop.permute.xlu0 %2542
      %2544 = vrot.lane.b32.xlu0 %v2050, 40
      %v2545 = vpop.permute.xlu0 %2544
      %2546 = vrot.lane.b32.xlu0 %v2094, 40
      %v2547 = vpop.permute.xlu0 %2546
      %2548 = vrot.lane.b32.xlu0 %v2053, 40
      %v2549 = vpop.permute.xlu0 %2548
      %2550 = vrot.lane.b32.xlu0 %v2095, 40
      %v2551 = vpop.permute.xlu0 %2550
      %2552 = vrot.lane.b32.xlu0 %v2056, 40
      %v2553 = vpop.permute.xlu0 %2552
      %2554 = vrot.lane.b32.xlu0 %v2096, 40
      %v2555 = vpop.permute.xlu0 %2554
      %2556 = vrot.lane.b32.xlu0 %v2059, 40
      %v2557 = vpop.permute.xlu0 %2556
      %2558 = vrot.lane.b32.xlu0 %v2097, 40
      %v2559 = vpop.permute.xlu0 %2558
      %2560 = vrot.lane.b32.xlu0 %v2062, 40
      %v2561 = vpop.permute.xlu0 %2560
      %2562 = vrot.lane.b32.xlu0 %v2098, 40
      %v2563 = vpop.permute.xlu0 %2562
      %2564 = vrot.lane.b32.xlu0 %v2065, 40
      %v2565 = vpop.permute.xlu0 %2564
      %2566 = vrot.lane.b32.xlu0 %v2099, 40
      %v2567 = vpop.permute.xlu0 %2566
      %2568 = vrot.lane.b32.xlu0 %v2068, 40
      %v2569 = vpop.permute.xlu0 %2568
      %2570 = vrot.lane.b32.xlu0 %v2100, 40
      %v2571 = vpop.permute.xlu0 %2570
      %2604 = vrot.lane.b32.xlu0 %v2006, 48
      %v2605 = vpop.permute.xlu0 %2604
      %2606 = vrot.lane.b32.xlu0 %v1931, 48
      %v2607 = vpop.permute.xlu0 %2606
      %2608 = vrot.lane.b32.xlu0 %v2007, 48
      %v2609 = vpop.permute.xlu0 %2608
      %2610 = vrot.lane.b32.xlu0 %v1934, 48
      %v2611 = vpop.permute.xlu0 %2610
      %2612 = vrot.lane.b32.xlu0 %v2008, 48
      %v2613 = vpop.permute.xlu0 %2612
      %2614 = vrot.lane.b32.xlu0 %v1937, 48
      %v2615 = vpop.permute.xlu0 %2614
      %2616 = vrot.lane.b32.xlu0 %v2009, 48
      %v2617 = vpop.permute.xlu0 %2616
      %2618 = vrot.lane.b32.xlu0 %v1940, 48
      %v2619 = vpop.permute.xlu0 %2618
      %2620 = vrot.lane.b32.xlu0 %v2010, 48
      %v2621 = vpop.permute.xlu0 %2620
      %2622 = vrot.lane.b32.xlu0 %v1943, 48
      %v2623 = vpop.permute.xlu0 %2622
      %2624 = vrot.lane.b32.xlu0 %v2011, 48
      %v2625 = vpop.permute.xlu0 %2624
      %2626 = vrot.lane.b32.xlu0 %v1946, 48
      %v2627 = vpop.permute.xlu0 %2626
      %2628 = vrot.lane.b32.xlu0 %v2012, 48
      %v2629 = vpop.permute.xlu0 %2628
      %2630 = vrot.lane.b32.xlu0 %v1949, 48
      %v2631 = vpop.permute.xlu0 %2630
      %2632 = vrot.lane.b32.xlu0 %v2013, 48
      %v2633 = vpop.permute.xlu0 %2632
      %2634 = vrot.lane.b32.xlu0 %v1952, 48
      %v2635 = vpop.permute.xlu0 %2634
      %2636 = vrot.lane.b32.xlu0 %v2014, 48
      %v2637 = vpop.permute.xlu0 %2636
      %2638 = vrot.lane.b32.xlu0 %v1955, 48
      %v2639 = vpop.permute.xlu0 %2638
      %2640 = vrot.lane.b32.xlu0 %v2015, 48
      %v2641 = vpop.permute.xlu0 %2640
      %2642 = vrot.lane.b32.xlu0 %v1958, 48
      %v2643 = vpop.permute.xlu0 %2642
      %2644 = vrot.lane.b32.xlu0 %v2016, 48
      %v2645 = vpop.permute.xlu0 %2644
      %2646 = vrot.lane.b32.xlu0 %v1961, 48
      %v2647 = vpop.permute.xlu0 %2646
      %2648 = vrot.lane.b32.xlu0 %v2017, 48
      %v2649 = vpop.permute.xlu0 %2648
      %2650 = vrot.lane.b32.xlu0 %v1964, 48
      %v2651 = vpop.permute.xlu0 %2650
      %2652 = vrot.lane.b32.xlu0 %v2018, 48
      %v2653 = vpop.permute.xlu0 %2652
      %2654 = vrot.lane.b32.xlu0 %v1967, 48
      %v2655 = vpop.permute.xlu0 %2654
      %2656 = vrot.lane.b32.xlu0 %v2019, 48
      %v2657 = vpop.permute.xlu0 %2656
      %2658 = vrot.lane.b32.xlu0 %v1970, 48
      %v2659 = vpop.permute.xlu0 %2658
      %2660 = vrot.lane.b32.xlu0 %v2020, 48
      %v2661 = vpop.permute.xlu0 %2660
      %2662 = vrot.lane.b32.xlu0 %v1973, 48
      %v2663 = vpop.permute.xlu0 %2662
      %2664 = vrot.lane.b32.xlu0 0.0, 48
      %v2665 = vpop.permute.xlu0 %2664
      %2697 = vrot.lane.b32.xlu0 %v1854, 56
      %v2698 = vpop.permute.xlu0 %2697
      %2699 = vrot.lane.b32.xlu0 %v1855, 56
      %v2700 = vpop.permute.xlu0 %2699
      %2701 = vrot.lane.b32.xlu0 %v1856, 56
      %v2702 = vpop.permute.xlu0 %2701
      %2703 = vrot.lane.b32.xlu0 %v1857, 56
      %v2704 = vpop.permute.xlu0 %2703
      %2705 = vrot.lane.b32.xlu0 %v1858, 56
      %v2706 = vpop.permute.xlu0 %2705
      %2707 = vrot.lane.b32.xlu0 %v1859, 56
      %v2708 = vpop.permute.xlu0 %2707
      %2709 = vrot.lane.b32.xlu0 %v1860, 56
      %v2710 = vpop.permute.xlu0 %2709
      %2711 = vrot.lane.b32.xlu0 %v1861, 56
      %v2712 = vpop.permute.xlu0 %2711
      %2713 = vrot.lane.b32.xlu0 %v1862, 56
      %v2714 = vpop.permute.xlu0 %2713
      %2715 = vrot.lane.b32.xlu0 %v1863, 56
      %v2716 = vpop.permute.xlu0 %2715
      %2717 = vrot.lane.b32.xlu0 %v1864, 56
      %v2718 = vpop.permute.xlu0 %2717
      %2719 = vrot.lane.b32.xlu0 %v1865, 56
      %v2720 = vpop.permute.xlu0 %2719
      %2721 = vrot.lane.b32.xlu0 %v1866, 56
      %v2722 = vpop.permute.xlu0 %2721
      %2723 = vrot.lane.b32.xlu0 %v1867, 56
      %v2724 = vpop.permute.xlu0 %2723
      %2725 = vrot.lane.b32.xlu0 %v1868, 56
      %v2726 = vpop.permute.xlu0 %2725
      %2727 = vrot.lane.b32.xlu0 %v1869, 56
      %v2728 = vpop.permute.xlu0 %2727
      %2729 = vrot.lane.b32.xlu0 %v1870, 56
      %v2730 = vpop.permute.xlu0 %2729
      %2731 = vrot.lane.b32.xlu0 %v1871, 56
      %v2732 = vpop.permute.xlu0 %2731
      %2733 = vrot.lane.b32.xlu0 %v1872, 56
      %v2734 = vpop.permute.xlu0 %2733
      %2735 = vrot.lane.b32.xlu0 %v1873, 56
      %v2736 = vpop.permute.xlu0 %2735
      %2737 = vrot.lane.b32.xlu0 %v1874, 56
      %v2738 = vpop.permute.xlu0 %2737
      %2739 = vrot.lane.b32.xlu0 %v1875, 56
      %v2740 = vpop.permute.xlu0 %2739
      %2741 = vrot.lane.b32.xlu0 %v1876, 56
      %v2742 = vpop.permute.xlu0 %2741
      %2743 = vrot.lane.b32.xlu0 %v1877, 56
      %v2744 = vpop.permute.xlu0 %2743
      %2745 = vrot.lane.b32.xlu0 %v1878, 56
      %v2746 = vpop.permute.xlu0 %2745
      %2747 = vrot.lane.b32.xlu0 %v1879, 56
      %v2748 = vpop.permute.xlu0 %2747
      %2749 = vrot.lane.b32.xlu0 %v1880, 56
      %v2750 = vpop.permute.xlu0 %2749
      %2751 = vrot.lane.b32.xlu0 %v1881, 56
      %v2752 = vpop.permute.xlu0 %2751
      %2753 = vrot.lane.b32.xlu0 %v1882, 56
      %v2754 = vpop.permute.xlu0 %2753
      %2755 = vrot.lane.b32.xlu0 %v1883, 56
      %v2756 = vpop.permute.xlu0 %2755
      %2757 = vrot.lane.b32.xlu0 0.0, 56
      %v2758 = vpop.permute.xlu0 %2757
      %2790 = vrot.lane.b32.xlu0 %v2026, 64
      %v2791 = vpop.permute.xlu0 %2790
      %2792 = vrot.lane.b32.xlu0 %v2086, 64
      %v2793 = vpop.permute.xlu0 %2792
      %2794 = vrot.lane.b32.xlu0 %v2029, 64
      %v2795 = vpop.permute.xlu0 %2794
      %2796 = vrot.lane.b32.xlu0 %v2087, 64
      %v2797 = vpop.permute.xlu0 %2796
      %2798 = vrot.lane.b32.xlu0 %v2032, 64
      %v2799 = vpop.permute.xlu0 %2798
      %2800 = vrot.lane.b32.xlu0 %v2088, 64
      %v2801 = vpop.permute.xlu0 %2800
      %2802 = vrot.lane.b32.xlu0 %v2035, 64
      %v2803 = vpop.permute.xlu0 %2802
      %2804 = vrot.lane.b32.xlu0 %v2089, 64
      %v2805 = vpop.permute.xlu0 %2804
      %2806 = vrot.lane.b32.xlu0 %v2038, 64
      %v2807 = vpop.permute.xlu0 %2806
      %2808 = vrot.lane.b32.xlu0 %v2090, 64
      %v2809 = vpop.permute.xlu0 %2808
      %2810 = vrot.lane.b32.xlu0 %v2041, 64
      %v2811 = vpop.permute.xlu0 %2810
      %2812 = vrot.lane.b32.xlu0 %v2091, 64
      %v2813 = vpop.permute.xlu0 %2812
      %2814 = vrot.lane.b32.xlu0 %v2044, 64
      %v2815 = vpop.permute.xlu0 %2814
      %2816 = vrot.lane.b32.xlu0 %v2092, 64
      %v2817 = vpop.permute.xlu0 %2816
      %2818 = vrot.lane.b32.xlu0 %v2047, 64
      %v2819 = vpop.permute.xlu0 %2818
      %2820 = vrot.lane.b32.xlu0 %v2093, 64
      %v2821 = vpop.permute.xlu0 %2820
      %2822 = vrot.lane.b32.xlu0 %v2050, 64
      %v2823 = vpop.permute.xlu0 %2822
      %2824 = vrot.lane.b32.xlu0 %v2094, 64
      %v2825 = vpop.permute.xlu0 %2824
      %2826 = vrot.lane.b32.xlu0 %v2053, 64
      %v2827 = vpop.permute.xlu0 %2826
      %2828 = vrot.lane.b32.xlu0 %v2095, 64
      %v2829 = vpop.permute.xlu0 %2828
      %2830 = vrot.lane.b32.xlu0 %v2056, 64
      %v2831 = vpop.permute.xlu0 %2830
      %2832 = vrot.lane.b32.xlu0 %v2096, 64
      %v2833 = vpop.permute.xlu0 %2832
      %2834 = vrot.lane.b32.xlu0 %v2059, 64
      %v2835 = vpop.permute.xlu0 %2834
      %2836 = vrot.lane.b32.xlu0 %v2097, 64
      %v2837 = vpop.permute.xlu0 %2836
      %2838 = vrot.lane.b32.xlu0 %v2062, 64
      %v2839 = vpop.permute.xlu0 %2838
      %2840 = vrot.lane.b32.xlu0 %v2098, 64
      %v2841 = vpop.permute.xlu0 %2840
      %2842 = vrot.lane.b32.xlu0 %v2065, 64
      %v2843 = vpop.permute.xlu0 %2842
      %2844 = vrot.lane.b32.xlu0 %v2099, 64
      %v2845 = vpop.permute.xlu0 %2844
      %2846 = vrot.lane.b32.xlu0 %v2068, 64
      %v2847 = vpop.permute.xlu0 %2846
      %2848 = vrot.lane.b32.xlu0 %v2100, 64
      %v2849 = vpop.permute.xlu0 %2848
      %2850 = vrot.lane.b32.xlu0 0.0, 64
      %v2851 = vpop.permute.xlu0 %2850
      %v2883 = vsel %vm1290, 0.0, %v582
      %v2884 = vsel %vm1290, %v2005, %v2102
      %v2885 = vsel %vm1290, %v1928, %v2104
      %v2886 = vsel %vm1290, %v2006, %v2106
      %v2887 = vsel %vm1290, %v1931, %v2108
      %v2888 = vsel %vm1290, %v2007, %v2110
      %v2889 = vsel %vm1290, %v1934, %v2112
      %v2890 = vsel %vm1290, %v2008, %v2114
      %v2891 = vsel %vm1290, %v1937, %v2116
      %v2892 = vsel %vm1290, %v2009, %v2118
      %v2893 = vsel %vm1290, %v1940, %v2120
      %v2894 = vsel %vm1290, %v2010, %v2122
      %v2895 = vsel %vm1290, %v1943, %v2124
      %v2896 = vsel %vm1290, %v2011, %v2126
      %v2897 = vsel %vm1290, %v1946, %v2128
      %v2898 = vsel %vm1290, %v2012, %v2130
      %v2899 = vsel %vm1290, %v1949, %v2132
      %v2900 = vsel %vm1290, %v2013, %v2134
      %v2901 = vsel %vm1290, %v1952, %v2136
      %v2902 = vsel %vm1290, %v2014, %v2138
      %v2903 = vsel %vm1290, %v1955, %v2140
      %v2904 = vsel %vm1290, %v2015, %v2142
      %v2905 = vsel %vm1290, %v1958, %v2144
      %v2906 = vsel %vm1290, %v2016, %v2146
      %v2907 = vsel %vm1290, %v1961, %v2148
      %v2908 = vsel %vm1290, %v2017, %v2150
      %v2909 = vsel %vm1290, %v1964, %v2152
      %v2910 = vsel %vm1290, %v2018, %v2154
      %v2911 = vsel %vm1290, %v1967, %v2156
      %v2912 = vsel %vm1290, %v2019, %v2158
      %v2913 = vsel %vm1290, %v1970, %v2160
      %v2914 = vsel %vm1355, %v2883, %v2207
      %v2915 = vsel %vm1355, %v2884, %v2209
      %v2916 = vsel %vm1355, %v2885, %v2211
      %v2917 = vsel %vm1355, %v2886, %v2213
      %v2918 = vsel %vm1355, %v2887, %v2215
      %v2919 = vsel %vm1355, %v2888, %v2217
      %v2920 = vsel %vm1355, %v2889, %v2219
      %v2921 = vsel %vm1355, %v2890, %v2221
      %v2922 = vsel %vm1355, %v2891, %v2223
      %v2923 = vsel %vm1355, %v2892, %v2225
      %v2924 = vsel %vm1355, %v2893, %v2227
      %v2925 = vsel %vm1355, %v2894, %v2229
      %v2926 = vsel %vm1355, %v2895, %v2231
      %v2927 = vsel %vm1355, %v2896, %v2233
      %v2928 = vsel %vm1355, %v2897, %v2235
      %v2929 = vsel %vm1355, %v2898, %v2237
      %v2930 = vsel %vm1355, %v2899, %v2239
      %v2931 = vsel %vm1355, %v2900, %v2241
      %v2932 = vsel %vm1355, %v2901, %v2243
      %v2933 = vsel %vm1355, %v2902, %v2245
      %v2934 = vsel %vm1355, %v2903, %v2247
      %v2935 = vsel %vm1355, %v2904, %v2249
      %v2936 = vsel %vm1355, %v2905, %v2251
      %v2937 = vsel %vm1355, %v2906, %v2253
      %v2938 = vsel %vm1355, %v2907, %v2255
      %v2939 = vsel %vm1355, %v2908, %v2257
      %v2940 = vsel %vm1355, %v2909, %v2259
      %v2941 = vsel %vm1355, %v2910, %v2261
      %v2942 = vsel %vm1355, %v2911, %v2263
      %v2943 = vsel %vm1355, %v2912, %v2265
      %v2944 = vsel %vm1355, %v2913, %v2267
      %v2945 = vsel %vm1421, %v2914, %v2316
      %v2946 = vsel %vm1421, %v2914, %v2318
      %v2947 = vsel %vm1421, %v2915, %v2320
      %v2948 = vsel %vm1421, %v2916, %v2322
      %v2949 = vsel %vm1421, %v2917, %v2324
      %v2950 = vsel %vm1421, %v2918, %v2326
      %v2951 = vsel %vm1421, %v2919, %v2328
      %v2952 = vsel %vm1421, %v2920, %v2330
      %v2953 = vsel %vm1421, %v2921, %v2332
      %v2954 = vsel %vm1421, %v2922, %v2334
      %v2955 = vsel %vm1421, %v2923, %v2336
      %v2956 = vsel %vm1421, %v2924, %v2338
      %v2957 = vsel %vm1421, %v2925, %v2340
      %v2958 = vsel %vm1421, %v2926, %v2342
      %v2959 = vsel %vm1421, %v2927, %v2344
      %v2960 = vsel %vm1421, %v2928, %v2346
      %v2961 = vsel %vm1421, %v2929, %v2348
      %v2962 = vsel %vm1421, %v2930, %v2350
      %v2963 = vsel %vm1421, %v2931, %v2352
      %v2964 = vsel %vm1421, %v2932, %v2354
      %v2965 = vsel %vm1421, %v2933, %v2356
      %v2966 = vsel %vm1421, %v2934, %v2358
      %v2967 = vsel %vm1421, %v2935, %v2360
      %v2968 = vsel %vm1421, %v2936, %v2362
      %v2969 = vsel %vm1421, %v2937, %v2364
      %v2970 = vsel %vm1421, %v2938, %v2366
      %v2971 = vsel %vm1421, %v2939, %v2368
      %v2972 = vsel %vm1421, %v2940, %v2370
      %v2973 = vsel %vm1421, %v2941, %v2372
      %v2974 = vsel %vm1421, %v2942, %v2374
      %v2975 = vsel %vm1421, %v2943, %v2376
      %v2976 = vsel %vm1421, %v2944, %v2378
      %v2977 = vsel %vm1487, %v2945, %v2412
      %v2978 = vsel %vm1487, %v2946, %v2414
      %v2979 = vsel %vm1487, %v2947, %v2416
      %v2980 = vsel %vm1487, %v2948, %v2418
      %v2981 = vsel %vm1487, %v2949, %v2420
      %v2982 = vsel %vm1487, %v2950, %v2422
      %v2983 = vsel %vm1487, %v2951, %v2424
      %v2984 = vsel %vm1487, %v2952, %v2426
      %v2985 = vsel %vm1487, %v2953, %v2428
      %v2986 = vsel %vm1487, %v2954, %v2430
      %v2987 = vsel %vm1487, %v2955, %v2432
      %v2988 = vsel %vm1487, %v2956, %v2434
      %v2989 = vsel %vm1487, %v2957, %v2436
      %v2990 = vsel %vm1487, %v2958, %v2438
      %v2991 = vsel %vm1487, %v2959, %v2440
      %v2992 = vsel %vm1487, %v2960, %v2442
      %v2993 = vsel %vm1487, %v2961, %v2444
      %v2994 = vsel %vm1487, %v2962, %v2446
      %v2995 = vsel %vm1487, %v2963, %v2448
      %v2996 = vsel %vm1487, %v2964, %v2450
      %v2997 = vsel %vm1487, %v2965, %v2452
      %v2998 = vsel %vm1487, %v2966, %v2454
      %v2999 = vsel %vm1487, %v2967, %v2456
      %v3000 = vsel %vm1487, %v2968, %v2458
      %v3001 = vsel %vm1487, %v2969, %v2460
      %v3002 = vsel %vm1487, %v2970, %v2462
      %v3003 = vsel %vm1487, %v2971, %v2464
      %v3004 = vsel %vm1487, %v2972, %v2466
      %v3005 = vsel %vm1487, %v2973, %v2468
      %v3006 = vsel %vm1487, %v2974, %v2470
      %v3007 = vsel %vm1487, %v2975, %v2472
      %v3008 = vsel %vm1487, %v2976, %v2474
      %vm3009 = vcmask 326656
      %v3010 = vsel %vm3009, %v2977, %v2509
      %v3011 = vsel %vm3009, %v2978, %v2511
      %v3012 = vsel %vm3009, %v2979, %v2513
      %v3013 = vsel %vm3009, %v2980, %v2515
      %v3014 = vsel %vm3009, %v2981, %v2517
      %v3015 = vsel %vm3009, %v2982, %v2519
      %v3016 = vsel %vm3009, %v2983, %v2521
      %v3017 = vsel %vm3009, %v2984, %v2523
      %v3018 = vsel %vm3009, %v2985, %v2525
      %v3019 = vsel %vm3009, %v2986, %v2527
      %v3020 = vsel %vm3009, %v2987, %v2529
      %v3021 = vsel %vm3009, %v2988, %v2531
      %v3022 = vsel %vm3009, %v2989, %v2533
      %v3023 = vsel %vm3009, %v2990, %v2535
      %v3024 = vsel %vm3009, %v2991, %v2537
      %v3025 = vsel %vm3009, %v2992, %v2539
      %v3026 = vsel %vm3009, %v2993, %v2541
      %v3027 = vsel %vm3009, %v2994, %v2543
      %v3028 = vsel %vm3009, %v2995, %v2545
      %v3029 = vsel %vm3009, %v2996, %v2547
      %v3030 = vsel %vm3009, %v2997, %v2549
      %v3031 = vsel %vm3009, %v2998, %v2551
      %v3032 = vsel %vm3009, %v2999, %v2553
      %v3033 = vsel %vm3009, %v3000, %v2555
      %v3034 = vsel %vm3009, %v3001, %v2557
      %v3035 = vsel %vm3009, %v3002, %v2559
      %v3036 = vsel %vm3009, %v3003, %v2561
      %v3037 = vsel %vm3009, %v3004, %v2563
      %v3038 = vsel %vm3009, %v3005, %v2565
      %v3039 = vsel %vm3009, %v3006, %v2567
      %v3040 = vsel %vm3009, %v3007, %v2569
      %v3041 = vsel %vm3009, %v3008, %v2571
      %vm3042 = vcmask 392192
      %v3043 = vsel %vm3042, %v3010, %v2605
      %v3044 = vsel %vm3042, %v3011, %v2607
      %v3045 = vsel %vm3042, %v3012, %v2609
      %v3046 = vsel %vm3042, %v3013, %v2611
      %v3047 = vsel %vm3042, %v3014, %v2613
      %v3048 = vsel %vm3042, %v3015, %v2615
      %v3049 = vsel %vm3042, %v3016, %v2617
      %v3050 = vsel %vm3042, %v3017, %v2619
      %v3051 = vsel %vm3042, %v3018, %v2621
      %v3052 = vsel %vm3042, %v3019, %v2623
      %v3053 = vsel %vm3042, %v3020, %v2625
      %v3054 = vsel %vm3042, %v3021, %v2627
      %v3055 = vsel %vm3042, %v3022, %v2629
      %v3056 = vsel %vm3042, %v3023, %v2631
      %v3057 = vsel %vm3042, %v3024, %v2633
      %v3058 = vsel %vm3042, %v3025, %v2635
      %v3059 = vsel %vm3042, %v3026, %v2637
      %v3060 = vsel %vm3042, %v3027, %v2639
      %v3061 = vsel %vm3042, %v3028, %v2641
      %v3062 = vsel %vm3042, %v3029, %v2643
      %v3063 = vsel %vm3042, %v3030, %v2645
      %v3064 = vsel %vm3042, %v3031, %v2647
      %v3065 = vsel %vm3042, %v3032, %v2649
      %v3066 = vsel %vm3042, %v3033, %v2651
      %v3067 = vsel %vm3042, %v3034, %v2653
      %v3068 = vsel %vm3042, %v3035, %v2655
      %v3069 = vsel %vm3042, %v3036, %v2657
      %v3070 = vsel %vm3042, %v3037, %v2659
      %v3071 = vsel %vm3042, %v3038, %v2661
      %v3072 = vsel %vm3042, %v3039, %v2663
      %v3073 = vsel %vm3042, %v3040, %v2665
      %v3074 = vsel %vm3042, %v3041, %v2665
      %vm3075 = vcmask 457728
      %v3076 = vsel %vm3075, %v3043, %v2698
      %v3077 = vsel %vm3075, %v3044, %v2700
      %v3078 = vsel %vm3075, %v3045, %v2702
      %v3079 = vsel %vm3075, %v3046, %v2704
      %v3080 = vsel %vm3075, %v3047, %v2706
      %v3081 = vsel %vm3075, %v3048, %v2708
      %v3082 = vsel %vm3075, %v3049, %v2710
      %v3083 = vsel %vm3075, %v3050, %v2712
      %v3084 = vsel %vm3075, %v3051, %v2714
      %v3085 = vsel %vm3075, %v3052, %v2716
      %v3086 = vsel %vm3075, %v3053, %v2718
      %v3087 = vsel %vm3075, %v3054, %v2720
      %v3088 = vsel %vm3075, %v3055, %v2722
      %v3089 = vsel %vm3075, %v3056, %v2724
      %v3090 = vsel %vm3075, %v3057, %v2726
      %v3091 = vsel %vm3075, %v3058, %v2728
      %v3092 = vsel %vm3075, %v3059, %v2730
      %v3093 = vsel %vm3075, %v3060, %v2732
      %v3094 = vsel %vm3075, %v3061, %v2734
      %v3095 = vsel %vm3075, %v3062, %v2736
      %v3096 = vsel %vm3075, %v3063, %v2738
      %v3097 = vsel %vm3075, %v3064, %v2740
      %v3098 = vsel %vm3075, %v3065, %v2742
      %v3099 = vsel %vm3075, %v3066, %v2744
      %v3100 = vsel %vm3075, %v3067, %v2746
      %v3101 = vsel %vm3075, %v3068, %v2748
      %v3102 = vsel %vm3075, %v3069, %v2750
      %v3103 = vsel %vm3075, %v3070, %v2752
      %v3104 = vsel %vm3075, %v3071, %v2754
      %v3105 = vsel %vm3075, %v3072, %v2756
      %v3106 = vsel %vm3075, %v3073, %v2758
      %v3107 = vsel %vm3075, %v3074, %v2758
      %vm3108 = vcmask 523264
      %v3109 = vsel %vm3108, %v3076, %v2791
      %v3110 = vsel %vm3108, %v3077, %v2793
      %v3111 = vsel %vm3108, %v3078, %v2795
      %v3112 = vsel %vm3108, %v3079, %v2797
      %v3113 = vsel %vm3108, %v3080, %v2799
      %v3114 = vsel %vm3108, %v3081, %v2801
      %v3115 = vsel %vm3108, %v3082, %v2803
      %v3116 = vsel %vm3108, %v3083, %v2805
      %v3117 = vsel %vm3108, %v3084, %v2807
      %v3118 = vsel %vm3108, %v3085, %v2809
      %v3119 = vsel %vm3108, %v3086, %v2811
      %v3120 = vsel %vm3108, %v3087, %v2813
      %v3121 = vsel %vm3108, %v3088, %v2815
      %v3122 = vsel %vm3108, %v3089, %v2817
      %v3123 = vsel %vm3108, %v3090, %v2819
      %v3124 = vsel %vm3108, %v3091, %v2821
      %v3125 = vsel %vm3108, %v3092, %v2823
      %v3126 = vsel %vm3108, %v3093, %v2825
      %v3127 = vsel %vm3108, %v3094, %v2827
      %v3128 = vsel %vm3108, %v3095, %v2829
      %v3129 = vsel %vm3108, %v3096, %v2831
      %v3130 = vsel %vm3108, %v3097, %v2833
      %v3131 = vsel %vm3108, %v3098, %v2835
      %v3132 = vsel %vm3108, %v3099, %v2837
      %v3133 = vsel %vm3108, %v3100, %v2839
      %v3134 = vsel %vm3108, %v3101, %v2841
      %v3135 = vsel %vm3108, %v3102, %v2843
      %v3136 = vsel %vm3108, %v3103, %v2845
      %v3137 = vsel %vm3108, %v3104, %v2847
      %v3138 = vsel %vm3108, %v3105, %v2849
      %v3139 = vsel %vm3108, %v3106, %v2851
      %v3140 = vsel %vm3108, %v3107, %v2851
      %v3142 = vlaneseq
      %v3143 = vshrl.u32 %v3142, 7
      %v3144 = vsub.s32 0, %v3143
      %v3145 = vrot.slane %v1893, %v3144
      %vm3147 = vcmask 588800
      %v3149 = vsel %vm3147, %v3109, 0
      %v3152 = vsel %vm3147, %v3110, 0
      %v3155 = vsel %vm3147, %v3111, 0
      %v3158 = vsel %vm3147, %v3112, 0
      %v3161 = vsel %vm3147, %v3113, 0
      %v3164 = vsel %vm3147, %v3114, 0
      %v3167 = vsel %vm3147, %v3115, 0
      %v3170 = vsel %vm3147, %v3116, 0
      %v3173 = vsel %vm3147, %v3117, 0
      %v3176 = vsel %vm3147, %v3118, 0
      %v3179 = vsel %vm3147, %v3119, 0
      %v3182 = vsel %vm3147, %v3120, 0
      %v3185 = vsel %vm3147, %v3121, 0
      %v3188 = vsel %vm3147, %v3122, 0
      %v3191 = vsel %vm3147, %v3123, 0
      %v3194 = vsel %vm3147, %v3124, 0
      %v3197 = vsel %vm3147, %v3125, 0
      %v3200 = vsel %vm3147, %v3126, 0
      %v3203 = vsel %vm3147, %v3127, 0
      %v3206 = vsel %vm3147, %v3128, 0
      %v3209 = vsel %vm3147, %v3129, 0
      %v3212 = vsel %vm3147, %v3130, 0
      %v3215 = vsel %vm3147, %v3131, 0
      %v3218 = vsel %vm3147, %v3132, 0
      %v3221 = vsel %vm3147, %v3133, 0
      %v3224 = vsel %vm3147, %v3134, 0
      %v3227 = vsel %vm3147, %v3135, 0
      %v3230 = vsel %vm3147, %v3136, 0
      %v3233 = vsel %vm3147, %v3137, 0
      %v3236 = vsel %vm3147, %v3138, 0
      %v3239 = vsel %vm3147, %v3139, 0
      %v3242 = vsel %vm3147, %v3140, 0
      %3244 = vmatprep.subr.mxu0 0.0
      %3245 = vmatpush1.msra.mxu0 0.0
      %3246 = vmatprep.subr.mxu0 0.0
      %3247 = vmatpush1.msra.mxu0 0.0
      %3248 = vmatprep.subr.mxu0 0.0
      %3249 = vmatpush1.msra.mxu0 0.0
      %3250 = vmatprep.subr.mxu0 0.0
      %3251 = vmatpush1.msra.mxu0 0.0
      %3252 = vmatprep.subr.mxu0 0.0
      %3253 = vmatpush1.msra.mxu0 0.0
      %3254 = vmatprep.subr.mxu0 0.0
      %3255 = vmatpush1.msra.mxu0 0.0
      %3256 = vmatprep.subr.mxu0 0.0
      %3257 = vmatpush1.msra.mxu0 0.0
      %3258 = vmatprep.subr.mxu0 0.0
      %3259 = vmatpush1.msra.mxu0 %v1892
      %3260 = vmatprep.subr.mxu0 0.0
      %3261 = vmatpush1.msra.mxu0 %v1891
      %3262 = vmatprep.subr.mxu0 0.0
      %3263 = vmatpush1.msra.mxu0 %v1890
      %3264 = vmatprep.subr.mxu0 0.0
      %3265 = vmatpush1.msra.mxu0 %v1889
      %3266 = vmatprep.subr.mxu0 0.0
      %3267 = vmatpush1.msra.mxu0 %v1888
      %3268 = vmatprep.subr.mxu0 0.0
      %3269 = vmatpush1.msra.mxu0 %v1887
      %3270 = vmatprep.subr.mxu0 0.0
      %3271 = vmatpush1.msra.mxu0 %v1886
      %3272 = vmatprep.subr.mxu0 0.0
      %3273 = vmatpush1.msra.mxu0 %v1885
      %3274 = vmatprep.subr.mxu0 0.0
      %3275 = vmatpush1.msra.mxu0 %v1884
      %3276 = vmatprep.subr.mxu0 0.0
      %3277 = vmatpush2.msra.mxu0 0.0
      %3278 = vmatprep.subr.mxu0 0.0
      %3279 = vmatpush2.msra.mxu0 0.0
      %3280 = vmatprep.subr.mxu0 0.0
      %3281 = vmatpush2.msra.mxu0 0.0
      %3282 = vmatprep.subr.mxu0 0.0
      %3283 = vmatpush2.msra.mxu0 0.0
      %3284 = vmatprep.subr.mxu0 0.0
      %3285 = vmatpush2.msra.mxu0 0.0
      %3286 = vmatprep.subr.mxu0 0.0
      %3287 = vmatpush2.msra.mxu0 0.0
      %3288 = vmatprep.subr.mxu0 0.0
      %3289 = vmatpush2.msra.mxu0 0.0
      %3290 = vmatprep.subr.mxu0 0.0
      %3291 = vmatpush2.msra.mxu0 0.0
      %3292 = vmatprep.subr.mxu0 0.0
      %3293 = vmatpush2.msra.mxu0 0.0
      %3294 = vmatprep.subr.mxu0 0.0
      %3295 = vmatpush2.msra.mxu0 0.0
      %3296 = vmatprep.subr.mxu0 0.0
      %3297 = vmatpush2.msra.mxu0 0.0
      %3298 = vmatprep.subr.mxu0 0.0
      %3299 = vmatpush2.msra.mxu0 0.0
      %3300 = vmatprep.subr.mxu0 0.0
      %3301 = vmatpush2.msra.mxu0 0.0
      %3302 = vmatprep.subr.mxu0 0.0
      %3303 = vmatpush2.msra.mxu0 0.0
      %3304 = vmatprep.subr.mxu0 0.0
      %3305 = vmatpush2.msra.mxu0 0.0
      %3306 = vmatprep.subr.mxu0 0.0
      %3307 = vmatpush2.msra.mxu0 0.0
      %3308 = vmatprep.mubr.f32.mxu0 0.0
      %3309 = vmatmul.mubr.f32.gmra.mxu0 %v3149
      %v3310 = vpop.f32.mrf.mxu0
      %v3311 = vadd.f32 %v3145, %v3310
      %v3312 = vpop.f32.mrf.mxu0
      %3313 = vmatprep.mubr.f32.mxu0 0.0
      %3314 = vmatmul.mubr.f32.gmra.mxu0 %v3152
      %v3315 = vpop.f32.mrf.mxu0
      %v3316 = vadd.f32 %v3145, %v3315
      %v3317 = vpop.f32.mrf.mxu0
      %3318 = vmatprep.mubr.f32.mxu0 0.0
      %3319 = vmatmul.mubr.f32.gmra.mxu0 %v3155
      %v3320 = vpop.f32.mrf.mxu0
      %v3321 = vadd.f32 %v3145, %v3320
      %v3322 = vpop.f32.mrf.mxu0
      %3323 = vmatprep.mubr.f32.mxu0 0.0
      %3324 = vmatmul.mubr.f32.gmra.mxu0 %v3158
      %v3325 = vpop.f32.mrf.mxu0
      %v3326 = vadd.f32 %v3145, %v3325
      %v3327 = vpop.f32.mrf.mxu0
      %3328 = vmatprep.mubr.f32.mxu0 0.0
      %3329 = vmatmul.mubr.f32.gmra.mxu0 %v3161
      %v3330 = vpop.f32.mrf.mxu0
      %v3331 = vadd.f32 %v3145, %v3330
      %v3332 = vpop.f32.mrf.mxu0
      %3333 = vmatprep.mubr.f32.mxu0 0.0
      %3334 = vmatmul.mubr.f32.gmra.mxu0 %v3164
      %v3335 = vpop.f32.mrf.mxu0
      %v3336 = vadd.f32 %v3145, %v3335
      %v3337 = vpop.f32.mrf.mxu0
      %3338 = vmatprep.mubr.f32.mxu0 0.0
      %3339 = vmatmul.mubr.f32.gmra.mxu0 %v3167
      %v3340 = vpop.f32.mrf.mxu0
      %v3341 = vadd.f32 %v3145, %v3340
      %v3342 = vpop.f32.mrf.mxu0
      %3343 = vmatprep.mubr.f32.mxu0 0.0
      %3344 = vmatmul.mubr.f32.gmra.mxu0 %v3170
      %v3345 = vpop.f32.mrf.mxu0
      %v3346 = vadd.f32 %v3145, %v3345
      %v3347 = vpop.f32.mrf.mxu0
      %3348 = vmatprep.mubr.f32.mxu0 0.0
      %3349 = vmatmul.mubr.f32.gmra.mxu0 %v3173
      %v3350 = vpop.f32.mrf.mxu0
      %v3351 = vadd.f32 %v3145, %v3350
      %v3352 = vpop.f32.mrf.mxu0
      %3353 = vmatprep.mubr.f32.mxu0 0.0
      %3354 = vmatmul.mubr.f32.gmra.mxu0 %v3176
      %v3355 = vpop.f32.mrf.mxu0
      %v3356 = vadd.f32 %v3145, %v3355
      %v3357 = vpop.f32.mrf.mxu0
      %3358 = vmatprep.mubr.f32.mxu0 0.0
      %3359 = vmatmul.mubr.f32.gmra.mxu0 %v3179
      %v3360 = vpop.f32.mrf.mxu0
      %v3361 = vadd.f32 %v3145, %v3360
      %v3362 = vpop.f32.mrf.mxu0
      %3363 = vmatprep.mubr.f32.mxu0 0.0
      %3364 = vmatmul.mubr.f32.gmra.mxu0 %v3182
      %v3365 = vpop.f32.mrf.mxu0
      %v3366 = vadd.f32 %v3145, %v3365
      %v3367 = vpop.f32.mrf.mxu0
      %3368 = vmatprep.mubr.f32.mxu0 0.0
      %3369 = vmatmul.mubr.f32.gmra.mxu0 %v3185
      %v3370 = vpop.f32.mrf.mxu0
      %v3371 = vadd.f32 %v3145, %v3370
      %v3372 = vpop.f32.mrf.mxu0
      %3373 = vmatprep.mubr.f32.mxu0 0.0
      %3374 = vmatmul.mubr.f32.gmra.mxu0 %v3188
      %v3375 = vpop.f32.mrf.mxu0
      %v3376 = vadd.f32 %v3145, %v3375
      %v3377 = vpop.f32.mrf.mxu0
      %3378 = vmatprep.mubr.f32.mxu0 0.0
      %3379 = vmatmul.mubr.f32.gmra.mxu0 %v3191
      %v3380 = vpop.f32.mrf.mxu0
      %v3381 = vadd.f32 %v3145, %v3380
      %v3382 = vpop.f32.mrf.mxu0
      %3383 = vmatprep.mubr.f32.mxu0 0.0
      %3384 = vmatmul.mubr.f32.gmra.mxu0 %v3194
      %v3385 = vpop.f32.mrf.mxu0
      %v3386 = vadd.f32 %v3145, %v3385
      %v3387 = vpop.f32.mrf.mxu0
      %3388 = vmatprep.mubr.f32.mxu0 0.0
      %3389 = vmatmul.mubr.f32.gmra.mxu0 %v3197
      %v3390 = vpop.f32.mrf.mxu0
      %v3391 = vadd.f32 %v3145, %v3390
      %v3392 = vpop.f32.mrf.mxu0
      %3393 = vmatprep.mubr.f32.mxu0 0.0
      %3394 = vmatmul.mubr.f32.gmra.mxu0 %v3200
      %v3395 = vpop.f32.mrf.mxu0
      %v3396 = vadd.f32 %v3145, %v3395
      %v3397 = vpop.f32.mrf.mxu0
      %3398 = vmatprep.mubr.f32.mxu0 0.0
      %3399 = vmatmul.mubr.f32.gmra.mxu0 %v3203
      %v3400 = vpop.f32.mrf.mxu0
      %v3401 = vadd.f32 %v3145, %v3400
      %v3402 = vpop.f32.mrf.mxu0
      %3403 = vmatprep.mubr.f32.mxu0 0.0
      %3404 = vmatmul.mubr.f32.gmra.mxu0 %v3206
      %v3405 = vpop.f32.mrf.mxu0
      %v3406 = vadd.f32 %v3145, %v3405
      %v3407 = vpop.f32.mrf.mxu0
      %3408 = vmatprep.mubr.f32.mxu0 0.0
      %3409 = vmatmul.mubr.f32.gmra.mxu0 %v3209
      %v3410 = vpop.f32.mrf.mxu0
      %v3411 = vadd.f32 %v3145, %v3410
      %v3412 = vpop.f32.mrf.mxu0
      %3413 = vmatprep.mubr.f32.mxu0 0.0
      %3414 = vmatmul.mubr.f32.gmra.mxu0 %v3212
      %v3415 = vpop.f32.mrf.mxu0
      %v3416 = vadd.f32 %v3145, %v3415
      %v3417 = vpop.f32.mrf.mxu0
      %3418 = vmatprep.mubr.f32.mxu0 0.0
      %3419 = vmatmul.mubr.f32.gmra.mxu0 %v3215
      %v3420 = vpop.f32.mrf.mxu0
      %v3421 = vadd.f32 %v3145, %v3420
      %v3422 = vpop.f32.mrf.mxu0
      %3423 = vmatprep.mubr.f32.mxu0 0.0
      %3424 = vmatmul.mubr.f32.gmra.mxu0 %v3218
      %v3425 = vpop.f32.mrf.mxu0
      %v3426 = vadd.f32 %v3145, %v3425
      %v3427 = vpop.f32.mrf.mxu0
      %3428 = vmatprep.mubr.f32.mxu0 0.0
      %3429 = vmatmul.mubr.f32.gmra.mxu0 %v3221
      %v3430 = vpop.f32.mrf.mxu0
      %v3431 = vadd.f32 %v3145, %v3430
      %v3432 = vpop.f32.mrf.mxu0
      %3433 = vmatprep.mubr.f32.mxu0 0.0
      %3434 = vmatmul.mubr.f32.gmra.mxu0 %v3224
      %v3435 = vpop.f32.mrf.mxu0
      %v3436 = vadd.f32 %v3145, %v3435
      %v3437 = vpop.f32.mrf.mxu0
      %3438 = vmatprep.mubr.f32.mxu0 0.0
      %3439 = vmatmul.mubr.f32.gmra.mxu0 %v3227
      %v3440 = vpop.f32.mrf.mxu0
      %v3441 = vadd.f32 %v3145, %v3440
      %v3442 = vpop.f32.mrf.mxu0
      %3443 = vmatprep.mubr.f32.mxu0 0.0
      %3444 = vmatmul.mubr.f32.gmra.mxu0 %v3230
      %v3445 = vpop.f32.mrf.mxu0
      %v3446 = vadd.f32 %v3145, %v3445
      %v3447 = vpop.f32.mrf.mxu0
      %3448 = vmatprep.mubr.f32.mxu0 0.0
      %3449 = vmatmul.mubr.f32.gmra.mxu0 %v3233
      %v3450 = vpop.f32.mrf.mxu0
      %v3451 = vadd.f32 %v3145, %v3450
      %v3452 = vpop.f32.mrf.mxu0
      %3453 = vmatprep.mubr.f32.mxu0 0.0
      %3454 = vmatmul.mubr.f32.gmra.mxu0 %v3236
      %v3455 = vpop.f32.mrf.mxu0
      %v3456 = vadd.f32 %v3145, %v3455
      %v3457 = vpop.f32.mrf.mxu0
      %3458 = vmatprep.mubr.f32.mxu0 0.0
      %3459 = vmatmul.mubr.f32.gmra.mxu0 %v3239
      %v3460 = vpop.f32.mrf.mxu0
      %v3461 = vadd.f32 %v3145, %v3460
      %v3462 = vpop.f32.mrf.mxu0
      %3463 = vmatprep.mubr.f32.mxu0 0.0
      %3464 = vmatmul.mubr.f32.gmra.mxu0 %v3242
      %v3465 = vpop.f32.mrf.mxu0
      %v3466 = vadd.f32 %v3145, %v3465
      %v3467 = vpop.f32.mrf.mxu0
      %3468 = vdwg.mxu0
      %v3469 = vmax.f32 %v3311, 0.0
      %v3470 = vmax.f32 %v3316, 0.0
      %v3471 = vmax.f32 %v3321, 0.0
      %v3472 = vmax.f32 %v3326, 0.0
      %v3473 = vmax.f32 %v3331, 0.0
      %v3474 = vmax.f32 %v3336, 0.0
      %v3475 = vmax.f32 %v3341, 0.0
      %v3476 = vmax.f32 %v3346, 0.0
      %v3477 = vmax.f32 %v3351, 0.0
      %v3478 = vmax.f32 %v3356, 0.0
      %v3479 = vmax.f32 %v3361, 0.0
      %v3480 = vmax.f32 %v3366, 0.0
      %v3481 = vmax.f32 %v3371, 0.0
      %v3482 = vmax.f32 %v3376, 0.0
      %v3483 = vmax.f32 %v3381, 0.0
      %v3484 = vmax.f32 %v3386, 0.0
      %v3485 = vmax.f32 %v3391, 0.0
      %v3486 = vmax.f32 %v3396, 0.0
      %v3487 = vmax.f32 %v3401, 0.0
      %v3488 = vmax.f32 %v3406, 0.0
      %v3489 = vmax.f32 %v3411, 0.0
      %v3490 = vmax.f32 %v3416, 0.0
      %v3491 = vmax.f32 %v3421, 0.0
      %v3492 = vmax.f32 %v3426, 0.0
      %v3493 = vmax.f32 %v3431, 0.0
      %v3494 = vmax.f32 %v3436, 0.0
      %v3495 = vmax.f32 %v3441, 0.0
      %v3496 = vmax.f32 %v3446, 0.0
      %v3497 = vmax.f32 %v3451, 0.0
      %v3498 = vmax.f32 %v3456, 0.0
      %v3499 = vmax.f32 %v3461, 0.0
      %v3500 = vmax.f32 %v3466, 0.0
      %3501 = vxpose.xlu0.b32.start [1/16] %v3469, 128
      %3502 = vxpose.xlu0.b32.cont [2/16] %v3470, 128
      %3503 = vxpose.xlu0.b32.cont [3/16] %v3471, 128
      %3504 = vxpose.xlu0.b32.cont [4/16] %v3472, 128
      %3505 = vxpose.xlu0.b32.cont [5/16] %v3473, 128
      %3506 = vxpose.xlu0.b32.cont [6/16] %v3474, 128
      %3507 = vxpose.xlu0.b32.cont [7/16] %v3475, 128
      %3508 = vxpose.xlu0.b32.cont [8/16] %v3476, 128
      %3509 = vxpose.xlu0.b32.cont [9/16] %v3477, 128
      %3510 = vxpose.xlu0.b32.cont [10/16] %v3478, 128
      %3511 = vxpose.xlu0.b32.cont [11/16] %v3479, 128
      %3512 = vxpose.xlu0.b32.cont [12/16] %v3480, 128
      %3513 = vxpose.xlu0.b32.cont [13/16] %v3481, 128
      %3514 = vxpose.xlu0.b32.cont [14/16] %v3482, 128
      %3515 = vxpose.xlu0.b32.cont [15/16] %v3483, 128
      %3516 = vxpose.xlu0.b32.end [16/16] %v3484, 128
      %v3517 = vpop.trf.xlu0
      %v3518 = vpop.trf.xlu0
      %v3519 = vpop.trf.xlu0
      %v3520 = vpop.trf.xlu0
      %v3521 = vpop.trf.xlu0
      %v3522 = vpop.trf.xlu0
      %v3523 = vpop.trf.xlu0
      %v3524 = vpop.trf.xlu0
      %v3525 = vpop.trf.xlu0
      %v3526 = vpop.trf.xlu0
      %v3527 = vpop.trf.xlu0
      %v3528 = vpop.trf.xlu0
      %v3529 = vpop.trf.xlu0
      %v3530 = vpop.trf.xlu0
      %v3531 = vpop.trf.xlu0
      %v3532 = vpop.trf.xlu0
      %3533 = vxpose.xlu0.b32.start [1/16] %v3485, 128
      %3534 = vxpose.xlu0.b32.cont [2/16] %v3486, 128
      %3535 = vxpose.xlu0.b32.cont [3/16] %v3487, 128
      %3536 = vxpose.xlu0.b32.cont [4/16] %v3488, 128
      %3537 = vxpose.xlu0.b32.cont [5/16] %v3489, 128
      %3538 = vxpose.xlu0.b32.cont [6/16] %v3490, 128
      %3539 = vxpose.xlu0.b32.cont [7/16] %v3491, 128
      %3540 = vxpose.xlu0.b32.cont [8/16] %v3492, 128
      %3541 = vxpose.xlu0.b32.cont [9/16] %v3493, 128
      %3542 = vxpose.xlu0.b32.cont [10/16] %v3494, 128
      %3543 = vxpose.xlu0.b32.cont [11/16] %v3495, 128
      %3544 = vxpose.xlu0.b32.cont [12/16] %v3496, 128
      %3545 = vxpose.xlu0.b32.cont [13/16] %v3497, 128
      %3546 = vxpose.xlu0.b32.cont [14/16] %v3498, 128
      %3547 = vxpose.xlu0.b32.cont [15/16] %v3499, 128
      %3548 = vxpose.xlu0.b32.end [16/16] %v3500, 128
      %v3549 = vpop.trf.xlu0
      %v3550 = vpop.trf.xlu0
      %v3551 = vpop.trf.xlu0
      %v3552 = vpop.trf.xlu0
      %v3553 = vpop.trf.xlu0
      %v3554 = vpop.trf.xlu0
      %v3555 = vpop.trf.xlu0
      %v3556 = vpop.trf.xlu0
      %v3557 = vpop.trf.xlu0
      %v3558 = vpop.trf.xlu0
      %v3559 = vpop.trf.xlu0
      %v3560 = vpop.trf.xlu0
      %v3561 = vpop.trf.xlu0
      %v3562 = vpop.trf.xlu0
      %v3563 = vpop.trf.xlu0
      %v3564 = vpop.trf.xlu0
      %3565 = vst [vmem:[%s224] sm:$0xff] %v3517
      %3566 = vst [vmem:[%s224 + $0x8] sm:$0xff] %v3549
      %p3567 = scmp.lt.s32.totalorder %s16, 1
      %s3568 = scalar_select %p3567, %s16, 1
      %s3569 = smul.addr %s3568, 2
      %s3570 = smul.addr %s3569, 8
      %s3571 = scalar_lea.vmem %s5, %s3570
      // Predicated region
      $region41: #{separable_conv_block.1} parent=39 // pred_check
        %p3572 = pneg %p144
      $region42: #{separable_conv_block.1} parent=39 // pred_check_branch
        %3574 = sbr.rel (%p3572) target = $region44
      $region43: #{separable_conv_block.1} parent=39 // pred_region
        _
      $region44: #{separable_conv_block.1} parent=39 // pred_fallthru
        _
    $region40: #{separable_conv_block.1} parent=5 // pred_fallthru
      _
    %p3575 = scmp.le.s32.totalorder 2, %s11
    // Predicated region
    $region45: #{separable_conv_block.1} parent=5 // pred_check
      %p3576 = pneg %p3575
    $region46: #{separable_conv_block.1} parent=5 // pred_check_branch
      %3578 = sbr.rel (%p3576) target = $region48
    $region47: #{separable_conv_block.1} parent=5 // pred_region
      %s3579 = ssub.s32 %s11, 2
      // Predicated region
      $region49: #{separable_conv_block.1} parent=47 // pred_check
        %p3580 = pneg %p150
      $region50: #{separable_conv_block.1} parent=47 // pred_check_branch
        %3582 = sbr.rel (%p3580) target = $region52
      $region51: #{separable_conv_block.1} parent=47 // pred_region
        %p3583 = scmp.lt.s32.totalorder %s17, 1
        %s3584 = scalar_select %p3583, %s17, 1
        %s3585 = smul.addr %s3584, 2
        %s3586 = smul.addr %s3585, 8
        %s3587 = scalar_lea.vmem %s5, %s3586
      $region52: #{separable_conv_block.1} parent=47 // pred_fallthru
        _
    $region48: #{separable_conv_block.1} parent=5 // pred_fallthru
      _
  $region6: #{separable_conv_block.1} parent=0 // loop_footer
    %s15 = sadd.s32 1, %s11
  $region7: #{separable_conv_block.1} parent=0 // loop_footer_branch
    %10 = sbr.rel target = $region3
  $region8: #{separable_conv_block.1} parent=0 // loop_exit
    _

</llo_original>
